<compile_context>
chip_gen: v6e
topology: v6e:2x2x1
jax: 0.10.0
libtpu: 0.0.40
codegen_flags: <defaults>
</compile_context>

<pallas_src>
import jax
import jax.numpy as jnp
from jax import lax
from jax.experimental import pallas as pl
from jax.experimental.pallas import tpu as pltpu


def _round_up(x, m):
    return (x + m - 1) // m * m


def _pick_time_block(seq_len, cap=32):
    for tb in range(min(seq_len, cap), 0, -1):
        if seq_len % tb == 0:
            return tb
    return 1


def _pad_gate_cols(w, H, Hp):
    """Pad the last (4H) axis so gate k starts at column k*Hp (128-lane aligned)."""
    if Hp == H:
        return w
    pad = [(0, 0)] * (w.ndim - 1) + [(0, Hp - H)]
    return jnp.concatenate(
        [jnp.pad(w[..., k * H:(k + 1) * H], pad) for k in range(4)], axis=-1)


def _lstm_recurrent_kernel(gx_ref, whh_hbm, h0_ref, c0_ref,
                           y_ref, hN_ref, cN_ref,
                           w_vmem, h_sc, c_sc, dma_sem):
    """Recurrent part of one LSTM layer.

    Grid: (batch_blocks ["parallel"], time_blocks ["arbitrary"]).

    gx_ref : (T_b, B_blk, 4*Hp)  precomputed x@W_ih + b for this time block
    whh_hbm: (Hp, 4*Hp)          raw HBM ref (memory_space=pl.ANY)
    h0_ref, c0_ref: (B_blk, Hp)  initial states for this batch block
    y_ref  : (T_b, B_blk, Hp)    per-step hidden outputs
    hN_ref, cN_ref: (B_blk, Hp)  final states (written on the last time block)
    w_vmem : (Hp, 4*Hp)          single-buffered resident copy of W_hh
    h_sc, c_sc: (B_blk, Hp) f32  recurrent carry across time blocks
    """
    t = pl.program_id(1)
    T_b = gx_ref.shape[0]
    Hp = h_sc.shape[-1]

    @pl.when(t == 0)
    def _init():
        # Load W_hh once per batch block; it stays resident in VMEM scratch
        # (single buffer) for every subsequent time block.
        cp = pltpu.make_async_copy(whh_hbm, w_vmem, dma_sem)
        cp.start()
        cp.wait()
        h_sc[...] = h0_ref[...].astype(jnp.float32)
        c_sc[...] = c0_ref[...].astype(jnp.float32)

    def step(tt, carry):
        h, c = carry
        gates = gx_ref[tt].astype(jnp.float32) + jnp.dot(
            h.astype(w_vmem.dtype), w_vmem[...],
            preferred_element_type=jnp.float32)          # (B_blk, 4Hp)
        i_g = jax.nn.sigmoid(gates[:, 0 * Hp:1 * Hp])     # 128-aligned slices
        f_g = jax.nn.sigmoid(gates[:, 1 * Hp:2 * Hp])
        g_g = jnp.tanh(gates[:, 2 * Hp:3 * Hp])
        o_g = jax.nn.sigmoid(gates[:, 3 * Hp:4 * Hp])
        c = f_g * c + i_g * g_g
        h = o_g * jnp.tanh(c)
        y_ref[tt] = h.astype(y_ref.dtype)
        return h, c

    h, c = lax.fori_loop(0, T_b, step, (h_sc[...], c_sc[...]), unroll=True)
    h_sc[...] = h
    c_sc[...] = c

    @pl.when(t == pl.num_programs(1) - 1)
    def _final():
        hN_ref[...] = h.astype(hN_ref.dtype)
        cN_ref[...] = c.astype(cN_ref.dtype)


def lstm_layer_pallas(gx, whh_p, h0_p, c0_p, *, time_block=None, batch_block=None):
    """gx: (S, Bp, 4*Hp) time-major precomputed gate inputs; whh_p: (Hp, 4*Hp);
    h0_p, c0_p: (Bp, Hp).  Returns (y: (S, Bp, Hp), hN: (Bp, Hp), cN: (Bp, Hp))."""
    S, Bp, G = gx.shape
    Hp = G // 4
    T_b = time_block or _pick_time_block(S)
    assert S % T_b == 0, (S, T_b)
    B_blk = batch_block or Bp
    assert Bp % B_blk == 0 and B_blk % 8 == 0, (Bp, B_blk)
    out_dtype = h0_p.dtype

    grid = (Bp // B_blk, S // T_b)

    grid_spec = pltpu.PrefetchScalarGridSpec(
        num_scalar_prefetch=0,
        grid=grid,
        in_specs=[
            pl.BlockSpec((T_b, B_blk, 4 * Hp), lambda b, t: (t, b, 0)),  # gx
            pl.BlockSpec(memory_space=pl.ANY),                           # W_hh (HBM)
            pl.BlockSpec((B_blk, Hp), lambda b, t: (b, 0)),              # h0
            pl.BlockSpec((B_blk, Hp), lambda b, t: (b, 0)),              # c0
        ],
        out_specs=(
            pl.BlockSpec((T_b, B_blk, Hp), lambda b, t: (t, b, 0)),      # y
            pl.BlockSpec((B_blk, Hp), lambda b, t: (b, 0)),              # hN
            pl.BlockSpec((B_blk, Hp), lambda b, t: (b, 0)),              # cN
        ),
        scratch_shapes=[
            pltpu.VMEM((Hp, 4 * Hp), whh_p.dtype),   # resident W_hh, single buffer
            pltpu.VMEM((B_blk, Hp), jnp.float32),    # h carry
            pltpu.VMEM((B_blk, Hp), jnp.float32),    # c carry
            pltpu.SemaphoreType.DMA(()),
        ],
    )

    out_shapes = (
        jax.ShapeDtypeStruct((S, Bp, Hp), out_dtype),
        jax.ShapeDtypeStruct((Bp, Hp), out_dtype),
        jax.ShapeDtypeStruct((Bp, Hp), out_dtype),
    )

    return pl.pallas_call(
        _lstm_recurrent_kernel,
        out_shape=out_shapes,
        grid_spec=grid_spec,
        compiler_params=pltpu.CompilerParams(
            # Batch blocks are independent (splittable across v7x TensorCores);
            # the time axis is the recurrence and must stay "arbitrary".
            dimension_semantics=("parallel", "arbitrary")),
    )(gx, whh_p, h0_p, c0_p)


def init_lstm_params(key, input_dim, hidden_dim, num_layers, dtype=jnp.float32):
    """Deterministic init mimicking nn.LSTM: U(-1/sqrt(H), 1/sqrt(H))."""
    k = 1.0 / jnp.sqrt(jnp.asarray(hidden_dim, jnp.float32))
    params = []
    for layer in range(num_layers):
        d_in = input_dim if layer == 0 else hidden_dim
        key, k1, k2, k3, k4 = jax.random.split(key, 5)
        w_ih = jax.random.uniform(k1, (4 * hidden_dim, d_in), dtype, -k, k)
        w_hh = jax.random.uniform(k2, (4 * hidden_dim, hidden_dim), dtype, -k, k)
        b_ih = jax.random.uniform(k3, (4 * hidden_dim,), dtype, -k, k)
        b_hh = jax.random.uniform(k4, (4 * hidden_dim,), dtype, -k, k)
        params.append({
            "wih": w_ih.T,            # (D_in, 4H) for kernel
            "whh": w_hh.T,            # (H, 4H)   for kernel
            "b": b_ih + b_hh,         # (4H,)
        })
    return params


def lstm_forward(x, params, hidden=None, cell=None, *, time_block=None,
                 batch_block=None):
    """Matches torch nn.LSTM(batch_first=True): x (B, S, D) -> (output, (h_n, c_n))."""
    B, S, _ = x.shape
    L = len(params)
    H = params[0]["whh"].shape[0]
    Hp = _round_up(H, 128)   # lane-aligned gate blocks (use bf16 weights for v6e/v7x prod)
    Bp = _round_up(B, 8)     # sublane-aligned batch

    if hidden is None:
        hidden = jnp.zeros((L, B, H), x.dtype)
        cell = jnp.zeros((L, B, H), x.dtype)

    # Pad batch once; padded rows evolve independently and are sliced off below.
    x_p = jnp.pad(x, ((0, Bp - B), (0, 0), (0, 0)))

    y = None
    h_list, c_list = [], []
    for l, p in enumerate(params):
        wih_p = _pad_gate_cols(p["wih"], H, Hp)                       # (D_in, 4Hp)
        whh_p = jnp.pad(_pad_gate_cols(p["whh"], H, Hp),
                        ((0, Hp - H), (0, 0)))                        # (Hp, 4Hp)
        b_p = _pad_gate_cols(p["b"], H, Hp)                           # (4Hp,)

        # Hoisted input projection: one big matmul over all timesteps (full MXU
        # utilization), bias folded in, produced directly in time-major layout
        # so no transpose of the sequence is ever materialized between layers.
        if l == 0:
            gx = jnp.einsum("bsd,dg->sbg", x_p, wih_p,
                            preferred_element_type=jnp.float32) + b_p
        else:
            wih_pp = jnp.pad(wih_p, ((0, Hp - wih_p.shape[0]), (0, 0)))
            gx = jnp.einsum("sbh,hg->sbg", y, wih_pp,
                            preferred_element_type=jnp.float32) + b_p

        h0_p = jnp.pad(hidden[l], ((0, Bp - B), (0, Hp - H)))
        c0_p = jnp.pad(cell[l], ((0, Bp - B), (0, Hp - H)))

        y, hN, cN = lstm_layer_pallas(gx, whh_p, h0_p, c0_p,
                                      time_block=time_block,
                                      batch_block=batch_block)
        h_list.append(hN[:B, :H])
        c_list.append(cN[:B, :H])

    output = jnp.transpose(y, (1, 0, 2))[:B, :, :H]   # back to batch_first
    return output, (jnp.stack(h_list), jnp.stack(c_list))


def lstm_forward_ref(x, params, hidden=None, cell=None):
    """Pure-JAX reference (same math, unpadded) for correctness checking."""
    B, S, _ = x.shape
    L = len(params)
    H = params[0]["whh"].shape[0]
    if hidden is None:
        hidden = jnp.zeros((L, B, H), x.dtype)
        cell = jnp.zeros((L, B, H), x.dtype)

    seq = x
    h_out, c_out = [], []
    for l in range(L):
        p = params[l]
        h = hidden[l]
        c = cell[l]
        outs = []
        for t in range(S):
            g = seq[:, t, :] @ p["wih"] + h @ p["whh"] + p["b"]
            i = jax.nn.sigmoid(g[:, 0 * H:1 * H])
            f = jax.nn.sigmoid(g[:, 1 * H:2 * H])
            gg = jnp.tanh(g[:, 2 * H:3 * H])
            o = jax.nn.sigmoid(g[:, 3 * H:4 * H])
            c = f * c + i * gg
            h = o * jnp.tanh(c)
            outs.append(h)
        seq = jnp.stack(outs, axis=1)
        h_out.append(h)
        c_out.append(c)
    return seq, (jnp.stack(h_out), jnp.stack(c_out))


if __name__ == "__main__":
    key = jax.random.PRNGKey(0)
    batch, seq, input_dim, hidden_dim, num_layers = 2, 8, 16, 32, 2

    key, kx, kp = jax.random.split(key, 3)
    x = jax.random.normal(kx, (batch, seq, input_dim), jnp.float32)
    params = init_lstm_params(kp, input_dim, hidden_dim, num_layers)

    # time_block=4 -> 2 time blocks per layer, exercising the cross-block
    # scratch carry of (h, c) as well as the resident-weight path.
    output, (h_n, c_n) = lstm_forward(x, params, time_block=4)
    jax.block_until_ready((output, h_n, c_n))

    out_ref, (h_ref, c_ref) = lstm_forward_ref(x, params)
    assert output.shape == (batch, seq, hidden_dim)
    assert h_n.shape == (num_layers, batch, hidden_dim)
    assert c_n.shape == (num_layers, batch, hidden_dim)
    assert jnp.allclose(output, out_ref, rtol=2e-3, atol=2e-3)
    assert jnp.allclose(h_n, h_ref, rtol=2e-3, atol=2e-3)
    assert jnp.allclose(c_n, c_ref, rtol=2e-3, atol=2e-3)

    print("KERNEL_OK")
</pallas_src>

<mosaic_0001>
module attributes {stable_mosaic.version = 11 : i64} {
  func.func @_lstm_recurrent_kernel(%arg0: i32, %arg1: i32, %arg2: memref<4x8x512xf32, #tpu.memory_space<vmem>>, %arg3: memref<128x512xf32, #tpu.memory_space<any>>, %arg4: memref<8x128xf32, #tpu.memory_space<vmem>>, %arg5: memref<8x128xf32, #tpu.memory_space<vmem>>, %arg6: memref<4x8x128xf32, #tpu.memory_space<vmem>>, %arg7: memref<8x128xf32, #tpu.memory_space<vmem>>, %arg8: memref<8x128xf32, #tpu.memory_space<vmem>>, %arg9: memref<128x512xf32, #tpu.memory_space<vmem>>, %arg10: memref<8x128xf32, #tpu.memory_space<vmem>>, %arg11: memref<8x128xf32, #tpu.memory_space<vmem>>, %arg12: memref<!tpu.dma_semaphore, #tpu.memory_space<semaphore_mem>>) attributes {dimension_semantics = [#tpu.dimension_semantics<parallel>, #tpu.dimension_semantics<arbitrary>], iteration_bounds = array<i64: 1, 2>, scalar_prefetch = 0 : i64, scratch_operands = 4 : i64, tpu.core_type = #tpu.core_type<tc>, window_params = [{transform_indices = @transform_0, window_bounds = array<i64: 4, 8, 512>}, {}, {transform_indices = @transform_2, window_bounds = array<i64: 8, 128>}, {transform_indices = @transform_3, window_bounds = array<i64: 8, 128>}, {transform_indices = @transform_4, window_bounds = array<i64: 4, 8, 128>}, {transform_indices = @transform_5, window_bounds = array<i64: 8, 128>}, {transform_indices = @transform_6, window_bounds = array<i64: 8, 128>}]} {
    %c0_i32 = arith.constant 0 : i32
    %0 = arith.cmpi eq, %arg1, %c0_i32 : i32
    %1 = arith.extui %0 : i1 to i32
    %c0_i32_0 = arith.constant 0 : i32
    %2 = arith.cmpi ne, %1, %c0_i32_0 : i32
    scf.if %2 {
      tpu.enqueue_dma source(%arg3 : memref<128x512xf32, #tpu.memory_space<any>>) target(%arg9 : memref<128x512xf32, #tpu.memory_space<vmem>>) target_semaphore(%arg12 : memref<!tpu.dma_semaphore, #tpu.memory_space<semaphore_mem>>)
      tpu.wait_dma2 semaphore(%arg12 : memref<!tpu.dma_semaphore, #tpu.memory_space<semaphore_mem>>) src(%arg3 : memref<128x512xf32, #tpu.memory_space<any>>) dst(%arg9 : memref<128x512xf32, #tpu.memory_space<vmem>>)
      %c0_50 = arith.constant 0 : index
      %c0_51 = arith.constant 0 : index
      %150 = vector.load %arg4[%c0_50, %c0_51] : memref<8x128xf32, #tpu.memory_space<vmem>>, vector<8x128xf32>
      %c0_52 = arith.constant 0 : index
      %c0_53 = arith.constant 0 : index
      %151 = vector.load %arg10[%c0_52, %c0_53] : memref<8x128xf32, #tpu.memory_space<vmem>>, vector<8x128xf32>
      tpu.vector_store %arg10[%c0_52, %c0_53], %150 {strides = array<i32>} : memref<8x128xf32, #tpu.memory_space<vmem>>, vector<8x128xf32>,
      %c0_54 = arith.constant 0 : index
      %c0_55 = arith.constant 0 : index
      %152 = vector.load %arg5[%c0_54, %c0_55] : memref<8x128xf32, #tpu.memory_space<vmem>>, vector<8x128xf32>
      %c0_56 = arith.constant 0 : index
      %c0_57 = arith.constant 0 : index
      %153 = vector.load %arg11[%c0_56, %c0_57] : memref<8x128xf32, #tpu.memory_space<vmem>>, vector<8x128xf32>
      tpu.vector_store %arg11[%c0_56, %c0_57], %152 {strides = array<i32>} : memref<8x128xf32, #tpu.memory_space<vmem>>, vector<8x128xf32>,
    } else {
    }
    %c0 = arith.constant 0 : index
    %c0_1 = arith.constant 0 : index
    %3 = vector.load %arg10[%c0, %c0_1] : memref<8x128xf32, #tpu.memory_space<vmem>>, vector<8x128xf32>
    %c0_2 = arith.constant 0 : index
    %c0_3 = arith.constant 0 : index
    %4 = vector.load %arg11[%c0_2, %c0_3] : memref<8x128xf32, #tpu.memory_space<vmem>>, vector<8x128xf32>
    %c0_i32_4 = arith.constant 0 : i32
    %5 = arith.index_cast %c0_i32_4 : i32 to index
    %c0_5 = arith.constant 0 : index
    %c0_6 = arith.constant 0 : index
    %6 = vector.load %arg2[%5, %c0_5, %c0_6] : memref<4x8x512xf32, #tpu.memory_space<vmem>>, vector<1x8x512xf32>
    %7 = vector.shape_cast %6 : vector<1x8x512xf32> to vector<8x512xf32>
    %c0_7 = arith.constant 0 : index
    %c0_8 = arith.constant 0 : index
    %8 = vector.load %arg9[%c0_7, %c0_8] : memref<128x512xf32, #tpu.memory_space<vmem>>, vector<128x512xf32>
    %cst = arith.constant dense<0.000000e+00> : vector<8x512xf32>
    %9 = tpu.matmul %3, %8, %cst {dimension_numbers = #tpu.dot_dimension_numbers<[1], [0], [0], [1], [0, 0, 1, 1], [], []>} : vector<8x128xf32>, vector<128x512xf32>, vector<8x512xf32> -> vector<8x512xf32>
    %10 = arith.addf %7, %9 : vector<8x512xf32>
    %11 = vector.extract_strided_slice %10 {offsets = [0, 0], sizes = [8, 128], strides = [1, 1]} : vector<8x512xf32> to vector<8x128xf32>
    %12 = arith.negf %11 : vector<8x128xf32>
    %13 = math.exp %12 : vector<8x128xf32>
    %cst_9 = arith.constant 1.000000e+00 : f32
    %14 = vector.broadcast %cst_9 : f32 to vector<8x128xf32>
    %15 = arith.addf %14, %13 : vector<8x128xf32>
    %16 = arith.divf %14, %15 : vector<8x128xf32>
    %17 = vector.extract_strided_slice %10 {offsets = [0, 128], sizes = [8, 128], strides = [1, 1]} : vector<8x512xf32> to vector<8x128xf32>
    %18 = arith.negf %17 : vector<8x128xf32>
    %19 = math.exp %18 : vector<8x128xf32>
    %cst_10 = arith.constant 1.000000e+00 : f32
    %20 = vector.broadcast %cst_10 : f32 to vector<8x128xf32>
    %21 = arith.addf %20, %19 : vector<8x128xf32>
    %22 = arith.divf %20, %21 : vector<8x128xf32>
    %23 = vector.extract_strided_slice %10 {offsets = [0, 256], sizes = [8, 128], strides = [1, 1]} : vector<8x512xf32> to vector<8x128xf32>
    %24 = math.tanh %23 : vector<8x128xf32>
    %25 = vector.extract_strided_slice %10 {offsets = [0, 384], sizes = [8, 128], strides = [1, 1]} : vector<8x512xf32> to vector<8x128xf32>
    %26 = arith.negf %25 : vector<8x128xf32>
    %27 = math.exp %26 : vector<8x128xf32>
    %cst_11 = arith.constant 1.000000e+00 : f32
    %28 = vector.broadcast %cst_11 : f32 to vector<8x128xf32>
    %29 = arith.addf %28, %27 : vector<8x128xf32>
    %30 = arith.divf %28, %29 : vector<8x128xf32>
    %31 = arith.mulf %22, %4 : vector<8x128xf32>
    %32 = arith.mulf %16, %24 : vector<8x128xf32>
    %33 = arith.addf %31, %32 : vector<8x128xf32>
    %34 = math.tanh %33 : vector<8x128xf32>
    %35 = arith.mulf %30, %34 : vector<8x128xf32>
    %36 = arith.index_cast %c0_i32_4 : i32 to index
    %c0_12 = arith.constant 0 : index
    %c0_13 = arith.constant 0 : index
    %37 = vector.load %arg6[%36, %c0_12, %c0_13] : memref<4x8x128xf32, #tpu.memory_space<vmem>>, vector<1x8x128xf32>
    %38 = vector.shape_cast %37 : vector<1x8x128xf32> to vector<8x128xf32>
    %39 = vector.shape_cast %35 : vector<8x128xf32> to vector<1x8x128xf32>
    tpu.vector_store %arg6[%36, %c0_12, %c0_13], %39 {strides = array<i32>} : memref<4x8x128xf32, #tpu.memory_space<vmem>>, vector<1x8x128xf32>,
    %c1_i32 = arith.constant 1 : i32
    %40 = arith.index_cast %c1_i32 : i32 to index
    %c0_14 = arith.constant 0 : index
    %c0_15 = arith.constant 0 : index
    %41 = vector.load %arg2[%40, %c0_14, %c0_15] : memref<4x8x512xf32, #tpu.memory_space<vmem>>, vector<1x8x512xf32>
    %42 = vector.shape_cast %41 : vector<1x8x512xf32> to vector<8x512xf32>
    %c0_16 = arith.constant 0 : index
    %c0_17 = arith.constant 0 : index
    %43 = vector.load %arg9[%c0_16, %c0_17] : memref<128x512xf32, #tpu.memory_space<vmem>>, vector<128x512xf32>
    %cst_18 = arith.constant dense<0.000000e+00> : vector<8x512xf32>
    %44 = tpu.matmul %35, %43, %cst_18 {dimension_numbers = #tpu.dot_dimension_numbers<[1], [0], [0], [1], [0, 0, 1, 1], [], []>} : vector<8x128xf32>, vector<128x512xf32>, vector<8x512xf32> -> vector<8x512xf32>
    %45 = arith.addf %42, %44 : vector<8x512xf32>
    %46 = vector.extract_strided_slice %45 {offsets = [0, 0], sizes = [8, 128], strides = [1, 1]} : vector<8x512xf32> to vector<8x128xf32>
    %47 = arith.negf %46 : vector<8x128xf32>
    %48 = math.exp %47 : vector<8x128xf32>
    %cst_19 = arith.constant 1.000000e+00 : f32
    %49 = vector.broadcast %cst_19 : f32 to vector<8x128xf32>
    %50 = arith.addf %49, %48 : vector<8x128xf32>
    %51 = arith.divf %49, %50 : vector<8x128xf32>
    %52 = vector.extract_strided_slice %45 {offsets = [0, 128], sizes = [8, 128], strides = [1, 1]} : vector<8x512xf32> to vector<8x128xf32>
    %53 = arith.negf %52 : vector<8x128xf32>
    %54 = math.exp %53 : vector<8x128xf32>
    %cst_20 = arith.constant 1.000000e+00 : f32
    %55 = vector.broadcast %cst_20 : f32 to vector<8x128xf32>
    %56 = arith.addf %55, %54 : vector<8x128xf32>
    %57 = arith.divf %55, %56 : vector<8x128xf32>
    %58 = vector.extract_strided_slice %45 {offsets = [0, 256], sizes = [8, 128], strides = [1, 1]} : vector<8x512xf32> to vector<8x128xf32>
    %59 = math.tanh %58 : vector<8x128xf32>
    %60 = vector.extract_strided_slice %45 {offsets = [0, 384], sizes = [8, 128], strides = [1, 1]} : vector<8x512xf32> to vector<8x128xf32>
    %61 = arith.negf %60 : vector<8x128xf32>
    %62 = math.exp %61 : vector<8x128xf32>
    %cst_21 = arith.constant 1.000000e+00 : f32
    %63 = vector.broadcast %cst_21 : f32 to vector<8x128xf32>
    %64 = arith.addf %63, %62 : vector<8x128xf32>
    %65 = arith.divf %63, %64 : vector<8x128xf32>
    %66 = arith.mulf %57, %33 : vector<8x128xf32>
    %67 = arith.mulf %51, %59 : vector<8x128xf32>
    %68 = arith.addf %66, %67 : vector<8x128xf32>
    %69 = math.tanh %68 : vector<8x128xf32>
    %70 = arith.mulf %65, %69 : vector<8x128xf32>
    %71 = arith.index_cast %c1_i32 : i32 to index
    %c0_22 = arith.constant 0 : index
    %c0_23 = arith.constant 0 : index
    %72 = vector.load %arg6[%71, %c0_22, %c0_23] : memref<4x8x128xf32, #tpu.memory_space<vmem>>, vector<1x8x128xf32>
    %73 = vector.shape_cast %72 : vector<1x8x128xf32> to vector<8x128xf32>
    %74 = vector.shape_cast %70 : vector<8x128xf32> to vector<1x8x128xf32>
    tpu.vector_store %arg6[%71, %c0_22, %c0_23], %74 {strides = array<i32>} : memref<4x8x128xf32, #tpu.memory_space<vmem>>, vector<1x8x128xf32>,
    %c2_i32 = arith.constant 2 : i32
    %75 = arith.index_cast %c2_i32 : i32 to index
    %c0_24 = arith.constant 0 : index
    %c0_25 = arith.constant 0 : index
    %76 = vector.load %arg2[%75, %c0_24, %c0_25] : memref<4x8x512xf32, #tpu.memory_space<vmem>>, vector<1x8x512xf32>
    %77 = vector.shape_cast %76 : vector<1x8x512xf32> to vector<8x512xf32>
    %c0_26 = arith.constant 0 : index
    %c0_27 = arith.constant 0 : index
    %78 = vector.load %arg9[%c0_26, %c0_27] : memref<128x512xf32, #tpu.memory_space<vmem>>, vector<128x512xf32>
    %cst_28 = arith.constant dense<0.000000e+00> : vector<8x512xf32>
    %79 = tpu.matmul %70, %78, %cst_28 {dimension_numbers = #tpu.dot_dimension_numbers<[1], [0], [0], [1], [0, 0, 1, 1], [], []>} : vector<8x128xf32>, vector<128x512xf32>, vector<8x512xf32> -> vector<8x512xf32>
    %80 = arith.addf %77, %79 : vector<8x512xf32>
    %81 = vector.extract_strided_slice %80 {offsets = [0, 0], sizes = [8, 128], strides = [1, 1]} : vector<8x512xf32> to vector<8x128xf32>
    %82 = arith.negf %81 : vector<8x128xf32>
    %83 = math.exp %82 : vector<8x128xf32>
    %cst_29 = arith.constant 1.000000e+00 : f32
    %84 = vector.broadcast %cst_29 : f32 to vector<8x128xf32>
    %85 = arith.addf %84, %83 : vector<8x128xf32>
    %86 = arith.divf %84, %85 : vector<8x128xf32>
    %87 = vector.extract_strided_slice %80 {offsets = [0, 128], sizes = [8, 128], strides = [1, 1]} : vector<8x512xf32> to vector<8x128xf32>
    %88 = arith.negf %87 : vector<8x128xf32>
    %89 = math.exp %88 : vector<8x128xf32>
    %cst_30 = arith.constant 1.000000e+00 : f32
    %90 = vector.broadcast %cst_30 : f32 to vector<8x128xf32>
    %91 = arith.addf %90, %89 : vector<8x128xf32>
    %92 = arith.divf %90, %91 : vector<8x128xf32>
    %93 = vector.extract_strided_slice %80 {offsets = [0, 256], sizes = [8, 128], strides = [1, 1]} : vector<8x512xf32> to vector<8x128xf32>
    %94 = math.tanh %93 : vector<8x128xf32>
    %95 = vector.extract_strided_slice %80 {offsets = [0, 384], sizes = [8, 128], strides = [1, 1]} : vector<8x512xf32> to vector<8x128xf32>
    %96 = arith.negf %95 : vector<8x128xf32>
    %97 = math.exp %96 : vector<8x128xf32>
    %cst_31 = arith.constant 1.000000e+00 : f32
    %98 = vector.broadcast %cst_31 : f32 to vector<8x128xf32>
    %99 = arith.addf %98, %97 : vector<8x128xf32>
    %100 = arith.divf %98, %99 : vector<8x128xf32>
    %101 = arith.mulf %92, %68 : vector<8x128xf32>
    %102 = arith.mulf %86, %94 : vector<8x128xf32>
    %103 = arith.addf %101, %102 : vector<8x128xf32>
    %104 = math.tanh %103 : vector<8x128xf32>
    %105 = arith.mulf %100, %104 : vector<8x128xf32>
    %106 = arith.index_cast %c2_i32 : i32 to index
    %c0_32 = arith.constant 0 : index
    %c0_33 = arith.constant 0 : index
    %107 = vector.load %arg6[%106, %c0_32, %c0_33] : memref<4x8x128xf32, #tpu.memory_space<vmem>>, vector<1x8x128xf32>
    %108 = vector.shape_cast %107 : vector<1x8x128xf32> to vector<8x128xf32>
    %109 = vector.shape_cast %105 : vector<8x128xf32> to vector<1x8x128xf32>
    tpu.vector_store %arg6[%106, %c0_32, %c0_33], %109 {strides = array<i32>} : memref<4x8x128xf32, #tpu.memory_space<vmem>>, vector<1x8x128xf32>,
    %c3_i32 = arith.constant 3 : i32
    %110 = arith.index_cast %c3_i32 : i32 to index
    %c0_34 = arith.constant 0 : index
    %c0_35 = arith.constant 0 : index
    %111 = vector.load %arg2[%110, %c0_34, %c0_35] : memref<4x8x512xf32, #tpu.memory_space<vmem>>, vector<1x8x512xf32>
    %112 = vector.shape_cast %111 : vector<1x8x512xf32> to vector<8x512xf32>
    %c0_36 = arith.constant 0 : index
    %c0_37 = arith.constant 0 : index
    %113 = vector.load %arg9[%c0_36, %c0_37] : memref<128x512xf32, #tpu.memory_space<vmem>>, vector<128x512xf32>
    %cst_38 = arith.constant dense<0.000000e+00> : vector<8x512xf32>
    %114 = tpu.matmul %105, %113, %cst_38 {dimension_numbers = #tpu.dot_dimension_numbers<[1], [0], [0], [1], [0, 0, 1, 1], [], []>} : vector<8x128xf32>, vector<128x512xf32>, vector<8x512xf32> -> vector<8x512xf32>
    %115 = arith.addf %112, %114 : vector<8x512xf32>
    %116 = vector.extract_strided_slice %115 {offsets = [0, 0], sizes = [8, 128], strides = [1, 1]} : vector<8x512xf32> to vector<8x128xf32>
    %117 = arith.negf %116 : vector<8x128xf32>
    %118 = math.exp %117 : vector<8x128xf32>
    %cst_39 = arith.constant 1.000000e+00 : f32
    %119 = vector.broadcast %cst_39 : f32 to vector<8x128xf32>
    %120 = arith.addf %119, %118 : vector<8x128xf32>
    %121 = arith.divf %119, %120 : vector<8x128xf32>
    %122 = vector.extract_strided_slice %115 {offsets = [0, 128], sizes = [8, 128], strides = [1, 1]} : vector<8x512xf32> to vector<8x128xf32>
    %123 = arith.negf %122 : vector<8x128xf32>
    %124 = math.exp %123 : vector<8x128xf32>
    %cst_40 = arith.constant 1.000000e+00 : f32
    %125 = vector.broadcast %cst_40 : f32 to vector<8x128xf32>
    %126 = arith.addf %125, %124 : vector<8x128xf32>
    %127 = arith.divf %125, %126 : vector<8x128xf32>
    %128 = vector.extract_strided_slice %115 {offsets = [0, 256], sizes = [8, 128], strides = [1, 1]} : vector<8x512xf32> to vector<8x128xf32>
    %129 = math.tanh %128 : vector<8x128xf32>
    %130 = vector.extract_strided_slice %115 {offsets = [0, 384], sizes = [8, 128], strides = [1, 1]} : vector<8x512xf32> to vector<8x128xf32>
    %131 = arith.negf %130 : vector<8x128xf32>
    %132 = math.exp %131 : vector<8x128xf32>
    %cst_41 = arith.constant 1.000000e+00 : f32
    %133 = vector.broadcast %cst_41 : f32 to vector<8x128xf32>
    %134 = arith.addf %133, %132 : vector<8x128xf32>
    %135 = arith.divf %133, %134 : vector<8x128xf32>
    %136 = arith.mulf %127, %103 : vector<8x128xf32>
    %137 = arith.mulf %121, %129 : vector<8x128xf32>
    %138 = arith.addf %136, %137 : vector<8x128xf32>
    %139 = math.tanh %138 : vector<8x128xf32>
    %140 = arith.mulf %135, %139 : vector<8x128xf32>
    %141 = arith.index_cast %c3_i32 : i32 to index
    %c0_42 = arith.constant 0 : index
    %c0_43 = arith.constant 0 : index
    %142 = vector.load %arg6[%141, %c0_42, %c0_43] : memref<4x8x128xf32, #tpu.memory_space<vmem>>, vector<1x8x128xf32>
    %143 = vector.shape_cast %142 : vector<1x8x128xf32> to vector<8x128xf32>
    %144 = vector.shape_cast %140 : vector<8x128xf32> to vector<1x8x128xf32>
    tpu.vector_store %arg6[%141, %c0_42, %c0_43], %144 {strides = array<i32>} : memref<4x8x128xf32, #tpu.memory_space<vmem>>, vector<1x8x128xf32>,
    %c4_i32 = arith.constant 4 : i32
    %c0_44 = arith.constant 0 : index
    %c0_45 = arith.constant 0 : index
    %145 = vector.load %arg10[%c0_44, %c0_45] : memref<8x128xf32, #tpu.memory_space<vmem>>, vector<8x128xf32>
    tpu.vector_store %arg10[%c0_44, %c0_45], %140 {strides = array<i32>} : memref<8x128xf32, #tpu.memory_space<vmem>>, vector<8x128xf32>,
    %c0_46 = arith.constant 0 : index
    %c0_47 = arith.constant 0 : index
    %146 = vector.load %arg11[%c0_46, %c0_47] : memref<8x128xf32, #tpu.memory_space<vmem>>, vector<8x128xf32>
    tpu.vector_store %arg11[%c0_46, %c0_47], %138 {strides = array<i32>} : memref<8x128xf32, #tpu.memory_space<vmem>>, vector<8x128xf32>,
    %c1_i32_48 = arith.constant 1 : i32
    %147 = arith.cmpi eq, %arg1, %c1_i32_48 : i32
    %148 = arith.extui %147 : i1 to i32
    %c0_i32_49 = arith.constant 0 : i32
    %149 = arith.cmpi ne, %148, %c0_i32_49 : i32
    scf.if %149 {
      %c0_50 = arith.constant 0 : index
      %c0_51 = arith.constant 0 : index
      %150 = vector.load %arg7[%c0_50, %c0_51] : memref<8x128xf32, #tpu.memory_space<vmem>>, vector<8x128xf32>
      tpu.vector_store %arg7[%c0_50, %c0_51], %140 {strides = array<i32>} : memref<8x128xf32, #tpu.memory_space<vmem>>, vector<8x128xf32>,
      %c0_52 = arith.constant 0 : index
      %c0_53 = arith.constant 0 : index
      %151 = vector.load %arg8[%c0_52, %c0_53] : memref<8x128xf32, #tpu.memory_space<vmem>>, vector<8x128xf32>
      tpu.vector_store %arg8[%c0_52, %c0_53], %138 {strides = array<i32>} : memref<8x128xf32, #tpu.memory_space<vmem>>, vector<8x128xf32>,
    } else {
    }
    return
  }
  func.func @transform_0(%arg0: i32, %arg1: i32) -> (i32, i32, i32) {
    %c0_i32 = arith.constant 0 : i32
    %c0_i32_0 = arith.constant 0 : i32
    return %arg1, %arg0, %c0_i32 : i32, i32, i32
  }
  func.func @transform_2(%arg0: i32, %arg1: i32) -> (i32, i32) {
    %c0_i32 = arith.constant 0 : i32
    %c0_i32_0 = arith.constant 0 : i32
    return %arg0, %c0_i32 : i32, i32
  }
  func.func @transform_3(%arg0: i32, %arg1: i32) -> (i32, i32) {
    %c0_i32 = arith.constant 0 : i32
    %c0_i32_0 = arith.constant 0 : i32
    return %arg0, %c0_i32 : i32, i32
  }
  func.func @transform_4(%arg0: i32, %arg1: i32) -> (i32, i32, i32) {
    %c0_i32 = arith.constant 0 : i32
    %c0_i32_0 = arith.constant 0 : i32
    return %arg1, %arg0, %c0_i32 : i32, i32, i32
  }
  func.func @transform_5(%arg0: i32, %arg1: i32) -> (i32, i32) {
    %c0_i32 = arith.constant 0 : i32
    %c0_i32_0 = arith.constant 0 : i32
    return %arg0, %c0_i32 : i32, i32
  }
  func.func @transform_6(%arg0: i32, %arg1: i32) -> (i32, i32) {
    %c0_i32 = arith.constant 0 : i32
    %c0_i32_0 = arith.constant 0 : i32
    return %arg0, %c0_i32 : i32, i32
  }
}

</mosaic_0001>

<llo_original>
// kernel: tpu_custom_call.1
$region0: #{tpu_custom_call.1}
  #allocation0 [shape = 'u32[]', space=smem, size = 0x4, offset = 0x4, fixed_abs, tag = 'smem constant byte address 0x4 - core index']
  #allocation1 [shape = 'u32[144,128]{1,0:T(1,128)}', space=vmem, size = 0x12000, scoped, tag = 'internal scratch']
  #allocation2 [shape = 'f32[128,512]{1,0:T(8,128)}', space=vmem, size = 0x40000, scoped, tag = 'scratch operand']
  #allocation3 [shape = 'f32[8,128]{1,0:T(8,128)}', space=vmem, size = 0x1000, scoped, tag = 'scratch operand']
  #allocation4 [shape = 'f32[8,128]{1,0:T(8,128)}', space=vmem, size = 0x1000, scoped, tag = 'scratch operand']
  #allocation5 [shape = 's32[1]{0}', space=sflag, size = 0x4, scoped, tag = 'scratch operand']
  #allocation16 [shape = 's32[]', space=sflag, size = 0x4, offset = 0, fixed_abs, tag = 'sflag constant byte address 0x0 - dummy sync flag']
  #allocation17 [shape = 's32[]', space=sflag, size = 0x4, offset = 0, fixed_abs, tag = 'sflag constant byte address 0x0 - dummy sync flag']
  #allocation18 [shape = 'u32[]', space=smem, size = 0x4, offset = 0x44, fixed_abs, tag = 'smem constant byte address 0x44 - assertion arg 0']
  #allocation19 [shape = 'u32[]', space=smem, size = 0x4, offset = 0x48, fixed_abs, tag = 'smem constant byte address 0x48 - assertion arg 1']
  %s0 = inlined_call_operand.hbm [shape: f32[8,8,512], index: 0, kind: input, shape index: {}]
  %s1 = inlined_call_operand.hbm [shape: f32[128,512], index: 1, kind: input, shape index: {}]
  %s2 = inlined_call_operand.hbm [shape: f32[8,128], index: 2, kind: input, shape index: {}]
  %s3 = inlined_call_operand.hbm [shape: f32[8,128], index: 3, kind: input, shape index: {}]
  %s4 = inlined_call_operand.hbm [shape: f32[8,8,128], index: 4, kind: output, shape index: {0}]
  %s5 = inlined_call_operand.hbm [shape: f32[8,128], index: 5, kind: output, shape index: {1}]
  %s6 = inlined_call_operand.hbm [shape: f32[8,128], index: 6, kind: output, shape index: {2}]
  %7 = xla_tuple %s4, %s5, %s6
  %s8 = sld [smem:[#allocation0]]
  $region85: #{tpu_custom_call.1} parent=0
    _
  %s10 = ssub.s32 1, %s8
  %s11 = scalar_select 0, %s10, %s8
  $region1: #{tpu_custom_call.1} parent=0
    #allocation6 [shape = 'u8[131072]{0}', space=vmem, size = 0x20000, scoped, tag = 'input window, operand 0']
    #allocation7 [shape = 's32[2]{0}', space=sflag, size = 0x8, scoped, tag = 'scoped memory for tpu_custom_call.1']
    #allocation8 [shape = 's32[2]{0}', space=sflag, size = 0x8, scoped, tag = 'scoped memory for tpu_custom_call.1']
    #allocation9 [shape = 'u8[4096]{0}', space=vmem, size = 0x1000, scoped, tag = 'input window, operand 2, single buffered']
    #allocation10 [shape = 's32[1]{0}', space=sflag, size = 0x4, scoped, tag = 'scoped memory for tpu_custom_call.1']
    #allocation11 [shape = 'u8[4096]{0}', space=vmem, size = 0x1000, scoped, tag = 'input window, operand 3, single buffered']
    #allocation12 [shape = 'u8[32768]{0}', space=vmem, size = 0x8000, scoped, tag = 'output window, operand 0']
    #allocation13 [shape = 'u8[4096]{0}', space=vmem, size = 0x1000, scoped, tag = 'output window, operand 1, single buffered']
    #allocation14 [shape = 's32[1]{0}', space=sflag, size = 0x4, scoped, tag = 'scoped memory for tpu_custom_call.1']
    #allocation15 [shape = 'u8[4096]{0}', space=vmem, size = 0x1000, scoped, tag = 'output window, operand 2, single buffered']
    %12 = vsyncpa [#allocation7], 0
    %s13 = scalar_lea.sflag [#allocation7], 1
    %14 = vsyncpa %s13, 0
    %15 = vsyncpa [#allocation10], 0
    %16 = vsyncpa [#allocation8], 0
    %s17 = scalar_lea.sflag [#allocation8], 1
    %18 = vsyncpa %s17, 0
    %19 = vsyncpa [#allocation14], 0
    loop: start=0, step=1, limit=4
    $region2: #{tpu_custom_call.1} parent=1 // loop_pre_header
      _
    $region3: #{tpu_custom_call.1} parent=1 // loop_header
      %s21 = sphi 0, %s25
      %p22 = scmp.ge.s32.totalorder %s21, 4
      %s28 = sphi 0, %s40
      %s29 = sphi 0, %s36
      %s30 = sphi 0, %s28
      %s31 = sphi 0, %s29
      %s32 = sphi 0, %s30
      %s33 = sphi 0, %s31
      %s45 = sphi 0, %s47
      %s48 = sphi 0, %s45
      %s49 = sphi 0, %s48
      %s65 = sphi 0, %s49
      %s71 = sphi 0, %s73
      %s74 = sphi 0, %s71
      %s75 = sphi 0, %s74
      %s91 = sphi 0, %s75
      %s97 = sphi 0, %s99
      %s100 = sphi 0, %s97
      %s101 = sphi 0, %s100
      %s117 = sphi 0, %s101
      %s125 = sphi 0, %s127
      %s128 = sphi 0, %s125
      %s129 = sphi 0, %s128
      %s145 = sphi 0, %s129
      %s151 = sphi 0, %s153
      %s154 = sphi 0, %s151
      %s155 = sphi 0, %s154
      %s171 = sphi 0, %s155
      %s177 = sphi 0, %s179
      %s180 = sphi 0, %s177
      %s181 = sphi 0, %s180
      %s197 = sphi 0, %s181
    $region4: #{tpu_custom_call.1} parent=1 // loop_header_branch
      %24 = sbr.rel (%p22) target = $region8
    $region5: #{tpu_custom_call.1} parent=1 // loop_body
      %s26 = ssub.s32 %s21, 1
      %s27 = ssub.s32 %s21, 2
      %s34 = sadd.s32 1, %s29
      %p35 = scmp.ge.s32.totalorder %s34, 2
      %s36 = scalar_select %p35, 0, %s34
      %s37 = sadd.s32 1, %s28
      %s38 = scalar_select %p35, %s37, %s28
      %p39 = scmp.ge.s32.totalorder %s38, 1
      %s40 = scalar_select %p39, 0, %s38
      %s41 = ssub.s32 %s29, %s36
      %s42 = ssub.s32 %s28, %s40
      %s43 = sor.u32 %s41, %s42
      %p44 = scmp.eq.s32.totalorder %s43, 0
      %s46 = sadd.s32 %s45, 1
      %s47 = scalar_select %p44, %s45, %s46
      %p50 = pneg %p44
      %p51 = scmp.eq.s32.totalorder %s21, 1
      %p52 = por %p50, %p51
      %p53 = scmp.ne.s32.totalorder %s45, %s48
      %p54 = scmp.eq.s32.totalorder %s21, 0
      %p55 = por %p53, %p54
      %p56 = scmp.ne.s32.totalorder %s45, %s48
      %p57 = scmp.eq.s32.totalorder %s26, 1
      %p58 = por %p56, %p57
      %p59 = scmp.ne.s32.totalorder %s48, %s49
      %p60 = scmp.eq.s32.totalorder %s26, 0
      %p61 = por %p59, %p60
      %p62 = scmp.ne.s32.totalorder %s48, %s49
      %p63 = scmp.eq.s32.totalorder %s27, 1
      %p64 = por %p62, %p63
      %p66 = scmp.ne.s32.totalorder %s49, %s65
      %p67 = scmp.eq.s32.totalorder %s27, 0
      %p68 = por %p66, %p67
      %s69 = ssub.s32 %s28, %s40
      %p70 = scmp.eq.s32.totalorder %s69, 0
      %s72 = sadd.s32 %s71, 1
      %s73 = scalar_select %p70, %s71, %s72
      %p76 = pneg %p70
      %p77 = scmp.eq.s32.totalorder %s21, 1
      %p78 = por %p76, %p77
      %p79 = scmp.ne.s32.totalorder %s71, %s74
      %p80 = scmp.eq.s32.totalorder %s21, 0
      %p81 = por %p79, %p80
      %p82 = scmp.ne.s32.totalorder %s71, %s74
      %p83 = scmp.eq.s32.totalorder %s26, 1
      %p84 = por %p82, %p83
      %p85 = scmp.ne.s32.totalorder %s74, %s75
      %p86 = scmp.eq.s32.totalorder %s26, 0
      %p87 = por %p85, %p86
      %p88 = scmp.ne.s32.totalorder %s74, %s75
      %p89 = scmp.eq.s32.totalorder %s27, 1
      %p90 = por %p88, %p89
      %p92 = scmp.ne.s32.totalorder %s75, %s91
      %p93 = scmp.eq.s32.totalorder %s27, 0
      %p94 = por %p92, %p93
      %s95 = ssub.s32 %s28, %s40
      %p96 = scmp.eq.s32.totalorder %s95, 0
      %s98 = sadd.s32 %s97, 1
      %s99 = scalar_select %p96, %s97, %s98
      %p102 = pneg %p96
      %p103 = scmp.eq.s32.totalorder %s21, 1
      %p104 = por %p102, %p103
      %p105 = scmp.ne.s32.totalorder %s97, %s100
      %p106 = scmp.eq.s32.totalorder %s21, 0
      %p107 = por %p105, %p106
      %p108 = scmp.ne.s32.totalorder %s97, %s100
      %p109 = scmp.eq.s32.totalorder %s26, 1
      %p110 = por %p108, %p109
      %p111 = scmp.ne.s32.totalorder %s100, %s101
      %p112 = scmp.eq.s32.totalorder %s26, 0
      %p113 = por %p111, %p112
      %p114 = scmp.ne.s32.totalorder %s100, %s101
      %p115 = scmp.eq.s32.totalorder %s27, 1
      %p116 = por %p114, %p115
      %p118 = scmp.ne.s32.totalorder %s101, %s117
      %p119 = scmp.eq.s32.totalorder %s27, 0
      %p120 = por %p118, %p119
      %s121 = ssub.s32 %s29, %s36
      %s122 = ssub.s32 %s28, %s40
      %s123 = sor.u32 %s121, %s122
      %p124 = scmp.eq.s32.totalorder %s123, 0
      %s126 = sadd.s32 %s125, 1
      %s127 = scalar_select %p124, %s125, %s126
      %p130 = pneg %p124
      %p131 = scmp.eq.s32.totalorder %s21, 1
      %p132 = por %p130, %p131
      %p133 = scmp.ne.s32.totalorder %s125, %s128
      %p134 = scmp.eq.s32.totalorder %s21, 0
      %p135 = por %p133, %p134
      %p136 = scmp.ne.s32.totalorder %s125, %s128
      %p137 = scmp.eq.s32.totalorder %s26, 1
      %p138 = por %p136, %p137
      %p139 = scmp.ne.s32.totalorder %s128, %s129
      %p140 = scmp.eq.s32.totalorder %s26, 0
      %p141 = por %p139, %p140
      %p142 = scmp.ne.s32.totalorder %s128, %s129
      %p143 = scmp.eq.s32.totalorder %s27, 1
      %p144 = por %p142, %p143
      %p146 = scmp.ne.s32.totalorder %s129, %s145
      %p147 = scmp.eq.s32.totalorder %s27, 0
      %p148 = por %p146, %p147
      %s149 = ssub.s32 %s28, %s40
      %p150 = scmp.eq.s32.totalorder %s149, 0
      %s152 = sadd.s32 %s151, 1
      %s153 = scalar_select %p150, %s151, %s152
      %p156 = pneg %p150
      %p157 = scmp.eq.s32.totalorder %s21, 1
      %p158 = por %p156, %p157
      %p159 = scmp.ne.s32.totalorder %s151, %s154
      %p160 = scmp.eq.s32.totalorder %s21, 0
      %p161 = por %p159, %p160
      %p162 = scmp.ne.s32.totalorder %s151, %s154
      %p163 = scmp.eq.s32.totalorder %s26, 1
      %p164 = por %p162, %p163
      %p165 = scmp.ne.s32.totalorder %s154, %s155
      %p166 = scmp.eq.s32.totalorder %s26, 0
      %p167 = por %p165, %p166
      %p168 = scmp.ne.s32.totalorder %s154, %s155
      %p169 = scmp.eq.s32.totalorder %s27, 1
      %p170 = por %p168, %p169
      %p172 = scmp.ne.s32.totalorder %s155, %s171
      %p173 = scmp.eq.s32.totalorder %s27, 0
      %p174 = por %p172, %p173
      %s175 = ssub.s32 %s28, %s40
      %p176 = scmp.eq.s32.totalorder %s175, 0
      %s178 = sadd.s32 %s177, 1
      %s179 = scalar_select %p176, %s177, %s178
      %p182 = pneg %p176
      %p183 = scmp.eq.s32.totalorder %s21, 1
      %p184 = por %p182, %p183
      %p185 = scmp.ne.s32.totalorder %s177, %s180
      %p186 = scmp.eq.s32.totalorder %s21, 0
      %p187 = por %p185, %p186
      %p188 = scmp.ne.s32.totalorder %s177, %s180
      %p189 = scmp.eq.s32.totalorder %s26, 1
      %p190 = por %p188, %p189
      %p191 = scmp.ne.s32.totalorder %s180, %s181
      %p192 = scmp.eq.s32.totalorder %s26, 0
      %p193 = por %p191, %p192
      %p194 = scmp.ne.s32.totalorder %s180, %s181
      %p195 = scmp.eq.s32.totalorder %s27, 1
      %p196 = por %p194, %p195
      %p198 = scmp.ne.s32.totalorder %s181, %s197
      %p199 = scmp.eq.s32.totalorder %s27, 0
      %p200 = por %p198, %p199
      %p201 = scmp.le.s32.totalorder 1, %s21
      %p202 = scmp.lt.s32.totalorder %s21, 3
      %p203 = pnand %p201, %p202
      %p204 = pneg %p203
      // Predicated region
      $region9: #{tpu_custom_call.1} parent=5 // pred_check
        _
      $region10: #{tpu_custom_call.1} parent=5 // pred_check_branch
        %206 = sbr.rel (%p203) target = $region12
      $region11: #{tpu_custom_call.1} parent=5 // pred_region
        %s207 = ssub.s32 %s21, 1
        // Predicated region
        $region13: #{tpu_custom_call.1} parent=11 // pred_check
          %p208 = pneg %p87
        $region14: #{tpu_custom_call.1} parent=11 // pred_check_branch
          %210 = sbr.rel (%p208) target = $region16
        $region15: #{tpu_custom_call.1} parent=11 // pred_region
          %s212 = ssub.s32 128, 128
          %213 = vsyncadd [#allocation10], %s212
          %s214 = smul.addr %s30, 128
          %s215 = scalar_lea.hbm %s2, %s214
          %s217 = sshll.u32 [#allocation9], 4
          %s218 = int_to_ptr.vmem [resolvable:$true] %s217
          %220 = dma.hbm_to_vmem [thread:$0]  %s215, 128, %s218, [#allocation10]
        $region16: #{tpu_custom_call.1} parent=11 // pred_fallthru
          _
        // Predicated region
        $region17: #{tpu_custom_call.1} parent=11 // pred_check
          %p221 = pneg %p113
        $region18: #{tpu_custom_call.1} parent=11 // pred_check_branch
          %223 = sbr.rel (%p221) target = $region20
        $region19: #{tpu_custom_call.1} parent=11 // pred_region
          %s225 = ssub.s32 128, 128
          %226 = vsyncadd [#allocation10], %s225
          %s227 = smul.addr %s30, 128
          %s228 = scalar_lea.hbm %s3, %s227
          %s230 = sshll.u32 [#allocation11], 4
          %s231 = int_to_ptr.vmem [resolvable:$true] %s230
          %233 = dma.hbm_to_vmem [thread:$0]  %s228, 128, %s231, [#allocation10]
        $region20: #{tpu_custom_call.1} parent=11 // pred_fallthru
          _
      $region12: #{tpu_custom_call.1} parent=5 // pred_fallthru
        _
      %p234 = scmp.lt.s32.totalorder %s21, 2
      // Predicated region
      $region21: #{tpu_custom_call.1} parent=5 // pred_check
        %p235 = pneg %p234
      $region22: #{tpu_custom_call.1} parent=5 // pred_check_branch
        %237 = sbr.rel (%p235) target = $region24
      $region23: #{tpu_custom_call.1} parent=5 // pred_region
        // Predicated region
        $region25: #{tpu_custom_call.1} parent=23 // pred_check
          %p238 = pneg %p55
        $region26: #{tpu_custom_call.1} parent=23 // pred_check_branch
          %240 = sbr.rel (%p238) target = $region28
        $region27: #{tpu_custom_call.1} parent=23 // pred_region
          %s241 = sand.u32 %s45, 1
          %s242 = scalar_lea.sflag [#allocation7], %s241
          %s243 = sand.u32 %s45, 1
          %s244 = smul.addr %s243, 128
          %s245 = scalar_lea.vmem [#allocation6], %s244
          %s246 = smul.u32 4, %s29
          %s248 = ssub.s32 2048, 2048
          %249 = vsyncadd %s242, %s248
          %s250 = smul.addr %s28, 4
          %s251 = smul.addr %s246, 4
          %s252 = sadd.s32 %s250, %s251
          %s253 = smul.addr %s252, 128
          %s254 = scalar_lea.hbm %s0, %s253
          %s255 = sshll.u32 %s245, 4
          %s256 = int_to_ptr.vmem [resolvable:$true] %s255
          %261 = dma.hbm_to_vmem [thread:$0]  %s254, 2048, %s256, %s242, 512, 512, 32
        $region28: #{tpu_custom_call.1} parent=23 // pred_fallthru
          _
      $region24: #{tpu_custom_call.1} parent=5 // pred_fallthru
        _
      %p262 = scmp.le.s32.totalorder 1, %s21
      %p263 = scmp.lt.s32.totalorder %s21, 3
      %p264 = pnand %p262, %p263
      %p265 = pneg %p264
      // Predicated region
      $region29: #{tpu_custom_call.1} parent=5 // pred_check
        _
      $region30: #{tpu_custom_call.1} parent=5 // pred_check_branch
        %267 = sbr.rel (%p264) target = $region32
      $region31: #{tpu_custom_call.1} parent=5 // pred_region
        %s268 = ssub.s32 %s21, 1
        %s269 = sand.u32 %s48, 1
        %s270 = scalar_lea.sflag [#allocation7], %s269
        %s271 = sand.u32 %s48, 1
        %s272 = smul.addr %s271, 128
        %s273 = scalar_lea.vmem [#allocation6], %s272
        // Predicated region
        $region33: #{tpu_custom_call.1} parent=31 // pred_check
          %p274 = pneg %p61
        $region34: #{tpu_custom_call.1} parent=31 // pred_check_branch
          %276 = sbr.rel (%p274) target = $region36
        $region35: #{tpu_custom_call.1} parent=31 // pred_region
          %277 = dma.done %s270, 2048
        $region36: #{tpu_custom_call.1} parent=31 // pred_fallthru
          _
        // Predicated region
        $region37: #{tpu_custom_call.1} parent=31 // pred_check
          %p278 = pneg %p87
        $region38: #{tpu_custom_call.1} parent=31 // pred_check_branch
          %280 = sbr.rel (%p278) target = $region40
        $region39: #{tpu_custom_call.1} parent=31 // pred_region
          %281 = dma.done [#allocation10], 128
        $region40: #{tpu_custom_call.1} parent=31 // pred_fallthru
          _
        // Predicated region
        $region41: #{tpu_custom_call.1} parent=31 // pred_check
          %p282 = pneg %p113
        $region42: #{tpu_custom_call.1} parent=31 // pred_check_branch
          %284 = sbr.rel (%p282) target = $region44
        $region43: #{tpu_custom_call.1} parent=31 // pred_region
          %285 = dma.done [#allocation10], 128
        $region44: #{tpu_custom_call.1} parent=31 // pred_fallthru
          _
        %s286 = sand.u32 %s48, 1
        %s287 = scalar_lea.sflag [#allocation7], %s286
        %s288 = sand.u32 %s48, 1
        %s289 = smul.addr %s288, 128
        %s290 = scalar_lea.vmem [#allocation6], %s289
        %p291 = pneg %p61
        %p292 = pneg %p58
        %p293 = pneg %p87
        %p294 = pneg %p84
        %p295 = pneg %p113
        %p296 = pneg %p110
        %p297 = pneg %p141
        %p298 = pneg %p138
        %s299 = sand.u32 %s128, 1
        %s300 = scalar_lea.sflag [#allocation8], %s299
        %s301 = sand.u32 %s128, 1
        %s302 = smul.addr %s301, 32
        %s303 = scalar_lea.vmem [#allocation12], %s302
        %p304 = pneg %p167
        %p305 = pneg %p164
        %p306 = pneg %p193
        %p307 = pneg %p190
        %s308 = smul.u32 4, %s31
        %s309 = smul.u32 4, %s31
        %p310 = scmp.eq.s32.totalorder %s31, 0
        // Predicated region
        $region45: #{tpu_custom_call.1} parent=31 // pred_check
          %p311 = pneg %p310
        $region46: #{tpu_custom_call.1} parent=31 // pred_check_branch
          %313 = sbr.rel (%p311) target = $region48
        $region47: #{tpu_custom_call.1} parent=31 // pred_region
          // Predicated region
          $region49: #{tpu_custom_call.1} parent=47 // pred_check
            _
          $region50: #{tpu_custom_call.1} parent=47 // pred_check_branch
            %315 = sbr.rel target = $region52
          $region51: #{tpu_custom_call.1} parent=47 // pred_region
            %316 = sst [smem:[#allocation18]] [#allocation17]
            %317 = sst [smem:[#allocation19]] [#allocation16]
          $region52: #{tpu_custom_call.1} parent=47 // pred_fallthru
            _
          %319 = shalt.err (0)
          %s321 = sshll.u32 [#allocation2], 4
          %s322 = int_to_ptr.vmem [resolvable:$true] %s321
          %324 = dma.hbm_to_vmem [thread:$0]  %s1, 8192, %s322, [#allocation5]
          %s325 = smul.u32 8, 16
          %s326 = smul.u32 %s325, 4
          %s327 = sshll.u32 %s326, 4
          %328 = dma.done [#allocation5], %s327
          %v329 = vld [vmem:[#allocation9] sm:$0xff]
          %330 = vst [vmem:[#allocation3] sm:$0xff] %v329
          %v331 = vld [vmem:[#allocation11] sm:$0xff]
          %332 = vst [vmem:[#allocation4] sm:$0xff] %v331
        $region48: #{tpu_custom_call.1} parent=31 // pred_fallthru
          _
        %v333 = vld [vmem:[#allocation3] sm:$0xff]
        %v334 = vld [vmem:[#allocation4] sm:$0xff]
        %v335 = vld [vmem:[%s273] sm:$0xff]
        %v336 = vld [vmem:[%s273 + $0x8] sm:$0xff]
        %v337 = vld [vmem:[%s273 + $0x10] sm:$0xff]
        %v338 = vld [vmem:[%s273 + $0x18] sm:$0xff]
        %v339 = vld [vmem:[#allocation2] sm:$0xff]
        %v340 = vld [vmem:[#allocation2 + $0x8] sm:$0xff]
        %v341 = vld [vmem:[#allocation2 + $0x10] sm:$0xff]
        %v342 = vld [vmem:[#allocation2 + $0x18] sm:$0xff]
        %v343 = vld [vmem:[#allocation2 + $0x20] sm:$0xff]
        %v344 = vld [vmem:[#allocation2 + $0x28] sm:$0xff]
        %v345 = vld [vmem:[#allocation2 + $0x30] sm:$0xff]
        %v346 = vld [vmem:[#allocation2 + $0x38] sm:$0xff]
        %v347 = vld [vmem:[#allocation2 + $0x40] sm:$0xff]
        %v348 = vld [vmem:[#allocation2 + $0x48] sm:$0xff]
        %v349 = vld [vmem:[#allocation2 + $0x50] sm:$0xff]
        %v350 = vld [vmem:[#allocation2 + $0x58] sm:$0xff]
        %v351 = vld [vmem:[#allocation2 + $0x60] sm:$0xff]
        %v352 = vld [vmem:[#allocation2 + $0x68] sm:$0xff]
        %v353 = vld [vmem:[#allocation2 + $0x70] sm:$0xff]
        %v354 = vld [vmem:[#allocation2 + $0x78] sm:$0xff]
        %v355 = vld [vmem:[#allocation2 + $0x80] sm:$0xff]
        %v356 = vld [vmem:[#allocation2 + $0x88] sm:$0xff]
        %v357 = vld [vmem:[#allocation2 + $0x90] sm:$0xff]
        %v358 = vld [vmem:[#allocation2 + $0x98] sm:$0xff]
        %v359 = vld [vmem:[#allocation2 + $0xa0] sm:$0xff]
        %v360 = vld [vmem:[#allocation2 + $0xa8] sm:$0xff]
        %v361 = vld [vmem:[#allocation2 + $0xb0] sm:$0xff]
        %v362 = vld [vmem:[#allocation2 + $0xb8] sm:$0xff]
        %v363 = vld [vmem:[#allocation2 + $0xc0] sm:$0xff]
        %v364 = vld [vmem:[#allocation2 + $0xc8] sm:$0xff]
        %v365 = vld [vmem:[#allocation2 + $0xd0] sm:$0xff]
        %v366 = vld [vmem:[#allocation2 + $0xd8] sm:$0xff]
        %v367 = vld [vmem:[#allocation2 + $0xe0] sm:$0xff]
        %v368 = vld [vmem:[#allocation2 + $0xe8] sm:$0xff]
        %v369 = vld [vmem:[#allocation2 + $0xf0] sm:$0xff]
        %v370 = vld [vmem:[#allocation2 + $0xf8] sm:$0xff]
        %v371 = vld [vmem:[#allocation2 + $0x100] sm:$0xff]
        %v372 = vld [vmem:[#allocation2 + $0x108] sm:$0xff]
        %v373 = vld [vmem:[#allocation2 + $0x110] sm:$0xff]
        %v374 = vld [vmem:[#allocation2 + $0x118] sm:$0xff]
        %v375 = vld [vmem:[#allocation2 + $0x120] sm:$0xff]
        %v376 = vld [vmem:[#allocation2 + $0x128] sm:$0xff]
        %v377 = vld [vmem:[#allocation2 + $0x130] sm:$0xff]
        %v378 = vld [vmem:[#allocation2 + $0x138] sm:$0xff]
        %v379 = vld [vmem:[#allocation2 + $0x140] sm:$0xff]
        %v380 = vld [vmem:[#allocation2 + $0x148] sm:$0xff]
        %v381 = vld [vmem:[#allocation2 + $0x150] sm:$0xff]
        %v382 = vld [vmem:[#allocation2 + $0x158] sm:$0xff]
        %v383 = vld [vmem:[#allocation2 + $0x160] sm:$0xff]
        %v384 = vld [vmem:[#allocation2 + $0x168] sm:$0xff]
        %v385 = vld [vmem:[#allocation2 + $0x170] sm:$0xff]
        %v386 = vld [vmem:[#allocation2 + $0x178] sm:$0xff]
        %v387 = vld [vmem:[#allocation2 + $0x180] sm:$0xff]
        %v388 = vld [vmem:[#allocation2 + $0x188] sm:$0xff]
        %v389 = vld [vmem:[#allocation2 + $0x190] sm:$0xff]
        %v390 = vld [vmem:[#allocation2 + $0x198] sm:$0xff]
        %v391 = vld [vmem:[#allocation2 + $0x1a0] sm:$0xff]
        %v392 = vld [vmem:[#allocation2 + $0x1a8] sm:$0xff]
        %v393 = vld [vmem:[#allocation2 + $0x1b0] sm:$0xff]
        %v394 = vld [vmem:[#allocation2 + $0x1b8] sm:$0xff]
        %v395 = vld [vmem:[#allocation2 + $0x1c0] sm:$0xff]
        %v396 = vld [vmem:[#allocation2 + $0x1c8] sm:$0xff]
        %v397 = vld [vmem:[#allocation2 + $0x1d0] sm:$0xff]
        %v398 = vld [vmem:[#allocation2 + $0x1d8] sm:$0xff]
        %v399 = vld [vmem:[#allocation2 + $0x1e0] sm:$0xff]
        %v400 = vld [vmem:[#allocation2 + $0x1e8] sm:$0xff]
        %v401 = vld [vmem:[#allocation2 + $0x1f0] sm:$0xff]
        %v402 = vld [vmem:[#allocation2 + $0x1f8] sm:$0xff]
        %403 = vmatprep.subr.mxu0 %v400
        %404 = vmatpush1.msra.mxu0 %v399
        %405 = vmatprep.subr.mxu0 %v396
        %406 = vmatpush1.msra.mxu0 %v395
        %407 = vmatprep.subr.mxu0 %v392
        %408 = vmatpush1.msra.mxu0 %v391
        %409 = vmatprep.subr.mxu0 %v388
        %410 = vmatpush1.msra.mxu0 %v387
        %411 = vmatprep.subr.mxu0 %v384
        %412 = vmatpush1.msra.mxu0 %v383
        %413 = vmatprep.subr.mxu0 %v380
        %414 = vmatpush1.msra.mxu0 %v379
        %415 = vmatprep.subr.mxu0 %v376
        %416 = vmatpush1.msra.mxu0 %v375
        %417 = vmatprep.subr.mxu0 %v372
        %418 = vmatpush1.msra.mxu0 %v371
        %419 = vmatprep.subr.mxu0 %v368
        %420 = vmatpush1.msra.mxu0 %v367
        %421 = vmatprep.subr.mxu0 %v364
        %422 = vmatpush1.msra.mxu0 %v363
        %423 = vmatprep.subr.mxu0 %v360
        %424 = vmatpush1.msra.mxu0 %v359
        %425 = vmatprep.subr.mxu0 %v356
        %426 = vmatpush1.msra.mxu0 %v355
        %427 = vmatprep.subr.mxu0 %v352
        %428 = vmatpush1.msra.mxu0 %v351
        %429 = vmatprep.subr.mxu0 %v348
        %430 = vmatpush1.msra.mxu0 %v347
        %431 = vmatprep.subr.mxu0 %v344
        %432 = vmatpush1.msra.mxu0 %v343
        %433 = vmatprep.subr.mxu0 %v340
        %434 = vmatpush1.msra.mxu0 %v339
        %435 = vmatprep.subr.mxu0 0.0
        %436 = vmatpush2.msra.mxu0 0.0
        %437 = vmatprep.subr.mxu0 0.0
        %438 = vmatpush2.msra.mxu0 0.0
        %439 = vmatprep.subr.mxu0 0.0
        %440 = vmatpush2.msra.mxu0 0.0
        %441 = vmatprep.subr.mxu0 0.0
        %442 = vmatpush2.msra.mxu0 0.0
        %443 = vmatprep.subr.mxu0 0.0
        %444 = vmatpush2.msra.mxu0 0.0
        %445 = vmatprep.subr.mxu0 0.0
        %446 = vmatpush2.msra.mxu0 0.0
        %447 = vmatprep.subr.mxu0 0.0
        %448 = vmatpush2.msra.mxu0 0.0
        %449 = vmatprep.subr.mxu0 0.0
        %450 = vmatpush2.msra.mxu0 0.0
        %451 = vmatprep.subr.mxu0 0.0
        %452 = vmatpush2.msra.mxu0 0.0
        %453 = vmatprep.subr.mxu0 0.0
        %454 = vmatpush2.msra.mxu0 0.0
        %455 = vmatprep.subr.mxu0 0.0
        %456 = vmatpush2.msra.mxu0 0.0
        %457 = vmatprep.subr.mxu0 0.0
        %458 = vmatpush2.msra.mxu0 0.0
        %459 = vmatprep.subr.mxu0 0.0
        %460 = vmatpush2.msra.mxu0 0.0
        %461 = vmatprep.subr.mxu0 0.0
        %462 = vmatpush2.msra.mxu0 0.0
        %463 = vmatprep.subr.mxu0 0.0
        %464 = vmatpush2.msra.mxu0 0.0
        %465 = vmatprep.subr.mxu0 0.0
        %466 = vmatpush2.msra.mxu0 0.0
        %467 = vmatprep.mubr.f32.mxu0 0.0
        %468 = vmatmul.mubr.f32.gmra.mxu0 %v333
        %v469 = vpop.f32.mrf.mxu0
        %v470 = vadd.f32 0.0, %v469
        %v471 = vpop.f32.mrf.mxu0
        %v472 = vadd.f32 0.0, %v471
        %473 = vdwg.mxu0
        %474 = vmatprep.subr.mxu0 %v402
        %475 = vmatpush1.msra.mxu0 %v401
        %476 = vmatprep.subr.mxu0 %v398
        %477 = vmatpush1.msra.mxu0 %v397
        %478 = vmatprep.subr.mxu0 %v394
        %479 = vmatpush1.msra.mxu0 %v393
        %480 = vmatprep.subr.mxu0 %v390
        %481 = vmatpush1.msra.mxu0 %v389
        %482 = vmatprep.subr.mxu0 %v386
        %483 = vmatpush1.msra.mxu0 %v385
        %484 = vmatprep.subr.mxu0 %v382
        %485 = vmatpush1.msra.mxu0 %v381
        %486 = vmatprep.subr.mxu0 %v378
        %487 = vmatpush1.msra.mxu0 %v377
        %488 = vmatprep.subr.mxu0 %v374
        %489 = vmatpush1.msra.mxu0 %v373
        %490 = vmatprep.subr.mxu0 %v370
        %491 = vmatpush1.msra.mxu0 %v369
        %492 = vmatprep.subr.mxu0 %v366
        %493 = vmatpush1.msra.mxu0 %v365
        %494 = vmatprep.subr.mxu0 %v362
        %495 = vmatpush1.msra.mxu0 %v361
        %496 = vmatprep.subr.mxu0 %v358
        %497 = vmatpush1.msra.mxu0 %v357
        %498 = vmatprep.subr.mxu0 %v354
        %499 = vmatpush1.msra.mxu0 %v353
        %500 = vmatprep.subr.mxu0 %v350
        %501 = vmatpush1.msra.mxu0 %v349
        %502 = vmatprep.subr.mxu0 %v346
        %503 = vmatpush1.msra.mxu0 %v345
        %504 = vmatprep.subr.mxu0 %v342
        %505 = vmatpush1.msra.mxu0 %v341
        %506 = vmatprep.subr.mxu0 0.0
        %507 = vmatpush2.msra.mxu0 0.0
        %508 = vmatprep.subr.mxu0 0.0
        %509 = vmatpush2.msra.mxu0 0.0
        %510 = vmatprep.subr.mxu0 0.0
        %511 = vmatpush2.msra.mxu0 0.0
        %512 = vmatprep.subr.mxu0 0.0
        %513 = vmatpush2.msra.mxu0 0.0
        %514 = vmatprep.subr.mxu0 0.0
        %515 = vmatpush2.msra.mxu0 0.0
        %516 = vmatprep.subr.mxu0 0.0
        %517 = vmatpush2.msra.mxu0 0.0
        %518 = vmatprep.subr.mxu0 0.0
        %519 = vmatpush2.msra.mxu0 0.0
        %520 = vmatprep.subr.mxu0 0.0
        %521 = vmatpush2.msra.mxu0 0.0
        %522 = vmatprep.subr.mxu0 0.0
        %523 = vmatpush2.msra.mxu0 0.0
        %524 = vmatprep.subr.mxu0 0.0
        %525 = vmatpush2.msra.mxu0 0.0
        %526 = vmatprep.subr.mxu0 0.0
        %527 = vmatpush2.msra.mxu0 0.0
        %528 = vmatprep.subr.mxu0 0.0
        %529 = vmatpush2.msra.mxu0 0.0
        %530 = vmatprep.subr.mxu0 0.0
        %531 = vmatpush2.msra.mxu0 0.0
        %532 = vmatprep.subr.mxu0 0.0
        %533 = vmatpush2.msra.mxu0 0.0
        %534 = vmatprep.subr.mxu0 0.0
        %535 = vmatpush2.msra.mxu0 0.0
        %536 = vmatprep.subr.mxu0 0.0
        %537 = vmatpush2.msra.mxu0 0.0
        %538 = vmatprep.mubr.f32.mxu0 0.0
        %539 = vmatmul.mubr.f32.gmra.mxu0 %v333
        %v540 = vpop.f32.mrf.mxu0
        %v541 = vadd.f32 0.0, %v540
        %v542 = vpop.f32.mrf.mxu0
        %v543 = vadd.f32 0.0, %v542
        %544 = vdwg.mxu0
        %v545 = vadd.f32 %v335, %v470
        %v546 = vadd.f32 %v336, %v472
        %v547 = vadd.f32 %v337, %v541
        %v548 = vadd.f32 %v338, %v543
        %v549 = vxor.u32 %v545, 2147483648
        %v550 = vmul.f32 %v549, 1.442695
        %v551 = vpow.pop %v550
        %v552 = vadd.f32 %v551, 1.0
        %v553 = vrcp.pop %v552
        %v554 = vmul.f32 1.0, %v553
        %v555 = vxor.u32 %v546, 2147483648
        %v556 = vmul.f32 %v555, 1.442695
        %v557 = vpow.pop %v556
        %v558 = vadd.f32 %v557, 1.0
        %v559 = vrcp.pop %v558
        %v560 = vmul.f32 1.0, %v559
        %v561 = vtanh.pop %v547
        %v562 = vxor.u32 %v548, 2147483648
        %v563 = vmul.f32 %v562, 1.442695
        %v564 = vpow.pop %v563
        %v565 = vadd.f32 %v564, 1.0
        %v566 = vrcp.pop %v565
        %v567 = vmul.f32 1.0, %v566
        %v568 = vmul.f32 %v560, %v334
        %v569 = vmul.f32 %v554, %v561
        %v570 = vadd.f32 %v568, %v569
        %v571 = vtanh.pop %v570
        %v572 = vmul.f32 %v567, %v571
        %573 = vst [vmem:[%s303] sm:$0xff] %v572
        %s574 = scalar_lea.vmem %s273, 32 [#allocation6]
        %v575 = vld [vmem:[%s574] sm:$0xff]
        %v576 = vld [vmem:[%s574 + $0x8] sm:$0xff]
        %v577 = vld [vmem:[%s574 + $0x10] sm:$0xff]
        %v578 = vld [vmem:[%s574 + $0x18] sm:$0xff]
        %v579 = vld [vmem:[#allocation2] sm:$0xff]
        %v580 = vld [vmem:[#allocation2 + $0x8] sm:$0xff]
        %v581 = vld [vmem:[#allocation2 + $0x10] sm:$0xff]
        %v582 = vld [vmem:[#allocation2 + $0x18] sm:$0xff]
        %v583 = vld [vmem:[#allocation2 + $0x20] sm:$0xff]
        %v584 = vld [vmem:[#allocation2 + $0x28] sm:$0xff]
        %v585 = vld [vmem:[#allocation2 + $0x30] sm:$0xff]
        %v586 = vld [vmem:[#allocation2 + $0x38] sm:$0xff]
        %v587 = vld [vmem:[#allocation2 + $0x40] sm:$0xff]
        %v588 = vld [vmem:[#allocation2 + $0x48] sm:$0xff]
        %v589 = vld [vmem:[#allocation2 + $0x50] sm:$0xff]
        %v590 = vld [vmem:[#allocation2 + $0x58] sm:$0xff]
        %v591 = vld [vmem:[#allocation2 + $0x60] sm:$0xff]
        %v592 = vld [vmem:[#allocation2 + $0x68] sm:$0xff]
        %v593 = vld [vmem:[#allocation2 + $0x70] sm:$0xff]
        %v594 = vld [vmem:[#allocation2 + $0x78] sm:$0xff]
        %v595 = vld [vmem:[#allocation2 + $0x80] sm:$0xff]
        %v596 = vld [vmem:[#allocation2 + $0x88] sm:$0xff]
        %v597 = vld [vmem:[#allocation2 + $0x90] sm:$0xff]
        %v598 = vld [vmem:[#allocation2 + $0x98] sm:$0xff]
        %v599 = vld [vmem:[#allocation2 + $0xa0] sm:$0xff]
        %v600 = vld [vmem:[#allocation2 + $0xa8] sm:$0xff]
        %v601 = vld [vmem:[#allocation2 + $0xb0] sm:$0xff]
        %v602 = vld [vmem:[#allocation2 + $0xb8] sm:$0xff]
        %v603 = vld [vmem:[#allocation2 + $0xc0] sm:$0xff]
        %v604 = vld [vmem:[#allocation2 + $0xc8] sm:$0xff]
        %v605 = vld [vmem:[#allocation2 + $0xd0] sm:$0xff]
        %v606 = vld [vmem:[#allocation2 + $0xd8] sm:$0xff]
        %v607 = vld [vmem:[#allocation2 + $0xe0] sm:$0xff]
        %v608 = vld [vmem:[#allocation2 + $0xe8] sm:$0xff]
        %v609 = vld [vmem:[#allocation2 + $0xf0] sm:$0xff]
        %v610 = vld [vmem:[#allocation2 + $0xf8] sm:$0xff]
        %v611 = vld [vmem:[#allocation2 + $0x100] sm:$0xff]
        %v612 = vld [vmem:[#allocation2 + $0x108] sm:$0xff]
        %v613 = vld [vmem:[#allocation2 + $0x110] sm:$0xff]
        %v614 = vld [vmem:[#allocation2 + $0x118] sm:$0xff]
        %v615 = vld [vmem:[#allocation2 + $0x120] sm:$0xff]
        %v616 = vld [vmem:[#allocation2 + $0x128] sm:$0xff]
        %v617 = vld [vmem:[#allocation2 + $0x130] sm:$0xff]
        %v618 = vld [vmem:[#allocation2 + $0x138] sm:$0xff]
        %v619 = vld [vmem:[#allocation2 + $0x140] sm:$0xff]
        %v620 = vld [vmem:[#allocation2 + $0x148] sm:$0xff]
        %v621 = vld [vmem:[#allocation2 + $0x150] sm:$0xff]
        %v622 = vld [vmem:[#allocation2 + $0x158] sm:$0xff]
        %v623 = vld [vmem:[#allocation2 + $0x160] sm:$0xff]
        %v624 = vld [vmem:[#allocation2 + $0x168] sm:$0xff]
        %v625 = vld [vmem:[#allocation2 + $0x170] sm:$0xff]
        %v626 = vld [vmem:[#allocation2 + $0x178] sm:$0xff]
        %v627 = vld [vmem:[#allocation2 + $0x180] sm:$0xff]
        %v628 = vld [vmem:[#allocation2 + $0x188] sm:$0xff]
        %v629 = vld [vmem:[#allocation2 + $0x190] sm:$0xff]
        %v630 = vld [vmem:[#allocation2 + $0x198] sm:$0xff]
        %v631 = vld [vmem:[#allocation2 + $0x1a0] sm:$0xff]
        %v632 = vld [vmem:[#allocation2 + $0x1a8] sm:$0xff]
        %v633 = vld [vmem:[#allocation2 + $0x1b0] sm:$0xff]
        %v634 = vld [vmem:[#allocation2 + $0x1b8] sm:$0xff]
        %v635 = vld [vmem:[#allocation2 + $0x1c0] sm:$0xff]
        %v636 = vld [vmem:[#allocation2 + $0x1c8] sm:$0xff]
        %v637 = vld [vmem:[#allocation2 + $0x1d0] sm:$0xff]
        %v638 = vld [vmem:[#allocation2 + $0x1d8] sm:$0xff]
        %v639 = vld [vmem:[#allocation2 + $0x1e0] sm:$0xff]
        %v640 = vld [vmem:[#allocation2 + $0x1e8] sm:$0xff]
        %v641 = vld [vmem:[#allocation2 + $0x1f0] sm:$0xff]
        %v642 = vld [vmem:[#allocation2 + $0x1f8] sm:$0xff]
        %643 = vmatprep.subr.mxu0 %v640
        %644 = vmatpush1.msra.mxu0 %v639
        %645 = vmatprep.subr.mxu0 %v636
        %646 = vmatpush1.msra.mxu0 %v635
        %647 = vmatprep.subr.mxu0 %v632
        %648 = vmatpush1.msra.mxu0 %v631
        %649 = vmatprep.subr.mxu0 %v628
        %650 = vmatpush1.msra.mxu0 %v627
        %651 = vmatprep.subr.mxu0 %v624
        %652 = vmatpush1.msra.mxu0 %v623
        %653 = vmatprep.subr.mxu0 %v620
        %654 = vmatpush1.msra.mxu0 %v619
        %655 = vmatprep.subr.mxu0 %v616
        %656 = vmatpush1.msra.mxu0 %v615
        %657 = vmatprep.subr.mxu0 %v612
        %658 = vmatpush1.msra.mxu0 %v611
        %659 = vmatprep.subr.mxu0 %v608
        %660 = vmatpush1.msra.mxu0 %v607
        %661 = vmatprep.subr.mxu0 %v604
        %662 = vmatpush1.msra.mxu0 %v603
        %663 = vmatprep.subr.mxu0 %v600
        %664 = vmatpush1.msra.mxu0 %v599
        %665 = vmatprep.subr.mxu0 %v596
        %666 = vmatpush1.msra.mxu0 %v595
        %667 = vmatprep.subr.mxu0 %v592
        %668 = vmatpush1.msra.mxu0 %v591
        %669 = vmatprep.subr.mxu0 %v588
        %670 = vmatpush1.msra.mxu0 %v587
        %671 = vmatprep.subr.mxu0 %v584
        %672 = vmatpush1.msra.mxu0 %v583
        %673 = vmatprep.subr.mxu0 %v580
        %674 = vmatpush1.msra.mxu0 %v579
        %675 = vmatprep.subr.mxu0 0.0
        %676 = vmatpush2.msra.mxu0 0.0
        %677 = vmatprep.subr.mxu0 0.0
        %678 = vmatpush2.msra.mxu0 0.0
        %679 = vmatprep.subr.mxu0 0.0
        %680 = vmatpush2.msra.mxu0 0.0
        %681 = vmatprep.subr.mxu0 0.0
        %682 = vmatpush2.msra.mxu0 0.0
        %683 = vmatprep.subr.mxu0 0.0
        %684 = vmatpush2.msra.mxu0 0.0
        %685 = vmatprep.subr.mxu0 0.0
        %686 = vmatpush2.msra.mxu0 0.0
        %687 = vmatprep.subr.mxu0 0.0
        %688 = vmatpush2.msra.mxu0 0.0
        %689 = vmatprep.subr.mxu0 0.0
        %690 = vmatpush2.msra.mxu0 0.0
        %691 = vmatprep.subr.mxu0 0.0
        %692 = vmatpush2.msra.mxu0 0.0
        %693 = vmatprep.subr.mxu0 0.0
        %694 = vmatpush2.msra.mxu0 0.0
        %695 = vmatprep.subr.mxu0 0.0
        %696 = vmatpush2.msra.mxu0 0.0
        %697 = vmatprep.subr.mxu0 0.0
        %698 = vmatpush2.msra.mxu0 0.0
        %699 = vmatprep.subr.mxu0 0.0
        %700 = vmatpush2.msra.mxu0 0.0
        %701 = vmatprep.subr.mxu0 0.0
        %702 = vmatpush2.msra.mxu0 0.0
        %703 = vmatprep.subr.mxu0 0.0
        %704 = vmatpush2.msra.mxu0 0.0
        %705 = vmatprep.subr.mxu0 0.0
        %706 = vmatpush2.msra.mxu0 0.0
        %707 = vmatprep.mubr.f32.mxu0 0.0
        %708 = vmatmul.mubr.f32.gmra.mxu0 %v572
        %v709 = vpop.f32.mrf.mxu0
        %v710 = vadd.f32 0.0, %v709
        %v711 = vpop.f32.mrf.mxu0
        %v712 = vadd.f32 0.0, %v711
        %713 = vdwg.mxu0
        %714 = vmatprep.subr.mxu0 %v642
        %715 = vmatpush1.msra.mxu0 %v641
        %716 = vmatprep.subr.mxu0 %v638
        %717 = vmatpush1.msra.mxu0 %v637
        %718 = vmatprep.subr.mxu0 %v634
        %719 = vmatpush1.msra.mxu0 %v633
        %720 = vmatprep.subr.mxu0 %v630
        %721 = vmatpush1.msra.mxu0 %v629
        %722 = vmatprep.subr.mxu0 %v626
        %723 = vmatpush1.msra.mxu0 %v625
        %724 = vmatprep.subr.mxu0 %v622
        %725 = vmatpush1.msra.mxu0 %v621
        %726 = vmatprep.subr.mxu0 %v618
        %727 = vmatpush1.msra.mxu0 %v617
        %728 = vmatprep.subr.mxu0 %v614
        %729 = vmatpush1.msra.mxu0 %v613
        %730 = vmatprep.subr.mxu0 %v610
        %731 = vmatpush1.msra.mxu0 %v609
        %732 = vmatprep.subr.mxu0 %v606
        %733 = vmatpush1.msra.mxu0 %v605
        %734 = vmatprep.subr.mxu0 %v602
        %735 = vmatpush1.msra.mxu0 %v601
        %736 = vmatprep.subr.mxu0 %v598
        %737 = vmatpush1.msra.mxu0 %v597
        %738 = vmatprep.subr.mxu0 %v594
        %739 = vmatpush1.msra.mxu0 %v593
        %740 = vmatprep.subr.mxu0 %v590
        %741 = vmatpush1.msra.mxu0 %v589
        %742 = vmatprep.subr.mxu0 %v586
        %743 = vmatpush1.msra.mxu0 %v585
        %744 = vmatprep.subr.mxu0 %v582
        %745 = vmatpush1.msra.mxu0 %v581
        %746 = vmatprep.subr.mxu0 0.0
        %747 = vmatpush2.msra.mxu0 0.0
        %748 = vmatprep.subr.mxu0 0.0
        %749 = vmatpush2.msra.mxu0 0.0
        %750 = vmatprep.subr.mxu0 0.0
        %751 = vmatpush2.msra.mxu0 0.0
        %752 = vmatprep.subr.mxu0 0.0
        %753 = vmatpush2.msra.mxu0 0.0
        %754 = vmatprep.subr.mxu0 0.0
        %755 = vmatpush2.msra.mxu0 0.0
        %756 = vmatprep.subr.mxu0 0.0
        %757 = vmatpush2.msra.mxu0 0.0
        %758 = vmatprep.subr.mxu0 0.0
        %759 = vmatpush2.msra.mxu0 0.0
        %760 = vmatprep.subr.mxu0 0.0
        %761 = vmatpush2.msra.mxu0 0.0
        %762 = vmatprep.subr.mxu0 0.0
        %763 = vmatpush2.msra.mxu0 0.0
        %764 = vmatprep.subr.mxu0 0.0
        %765 = vmatpush2.msra.mxu0 0.0
        %766 = vmatprep.subr.mxu0 0.0
        %767 = vmatpush2.msra.mxu0 0.0
        %768 = vmatprep.subr.mxu0 0.0
        %769 = vmatpush2.msra.mxu0 0.0
        %770 = vmatprep.subr.mxu0 0.0
        %771 = vmatpush2.msra.mxu0 0.0
        %772 = vmatprep.subr.mxu0 0.0
        %773 = vmatpush2.msra.mxu0 0.0
        %774 = vmatprep.subr.mxu0 0.0
        %775 = vmatpush2.msra.mxu0 0.0
        %776 = vmatprep.subr.mxu0 0.0
        %777 = vmatpush2.msra.mxu0 0.0
        %778 = vmatprep.mubr.f32.mxu0 0.0
        %779 = vmatmul.mubr.f32.gmra.mxu0 %v572
        %v780 = vpop.f32.mrf.mxu0
        %v781 = vadd.f32 0.0, %v780
        %v782 = vpop.f32.mrf.mxu0
        %v783 = vadd.f32 0.0, %v782
        %784 = vdwg.mxu0
        %v785 = vadd.f32 %v575, %v710
        %v786 = vadd.f32 %v576, %v712
        %v787 = vadd.f32 %v577, %v781
        %v788 = vadd.f32 %v578, %v783
        %v789 = vxor.u32 %v785, 2147483648
        %v790 = vmul.f32 %v789, 1.442695
        %v791 = vpow.pop %v790
        %v792 = vadd.f32 %v791, 1.0
        %v793 = vrcp.pop %v792
        %v794 = vmul.f32 1.0, %v793
        %v795 = vxor.u32 %v786, 2147483648
        %v796 = vmul.f32 %v795, 1.442695
        %v797 = vpow.pop %v796
        %v798 = vadd.f32 %v797, 1.0
        %v799 = vrcp.pop %v798
        %v800 = vmul.f32 1.0, %v799
        %v801 = vtanh.pop %v787
        %v802 = vxor.u32 %v788, 2147483648
        %v803 = vmul.f32 %v802, 1.442695
        %v804 = vpow.pop %v803
        %v805 = vadd.f32 %v804, 1.0
        %v806 = vrcp.pop %v805
        %v807 = vmul.f32 1.0, %v806
        %v808 = vmul.f32 %v800, %v570
        %v809 = vmul.f32 %v794, %v801
        %v810 = vadd.f32 %v808, %v809
        %v811 = vtanh.pop %v810
        %v812 = vmul.f32 %v807, %v811
        %s813 = scalar_lea.vmem %s303, 8 [#allocation12]
        %814 = vst [vmem:[%s813] sm:$0xff] %v812
        %s815 = scalar_lea.vmem %s273, 64 [#allocation6]
        %v816 = vld [vmem:[%s815] sm:$0xff]
        %v817 = vld [vmem:[%s815 + $0x8] sm:$0xff]
        %v818 = vld [vmem:[%s815 + $0x10] sm:$0xff]
        %v819 = vld [vmem:[%s815 + $0x18] sm:$0xff]
        %v820 = vld [vmem:[#allocation2] sm:$0xff]
        %v821 = vld [vmem:[#allocation2 + $0x8] sm:$0xff]
        %v822 = vld [vmem:[#allocation2 + $0x10] sm:$0xff]
        %v823 = vld [vmem:[#allocation2 + $0x18] sm:$0xff]
        %v824 = vld [vmem:[#allocation2 + $0x20] sm:$0xff]
        %v825 = vld [vmem:[#allocation2 + $0x28] sm:$0xff]
        %v826 = vld [vmem:[#allocation2 + $0x30] sm:$0xff]
        %v827 = vld [vmem:[#allocation2 + $0x38] sm:$0xff]
        %v828 = vld [vmem:[#allocation2 + $0x40] sm:$0xff]
        %v829 = vld [vmem:[#allocation2 + $0x48] sm:$0xff]
        %v830 = vld [vmem:[#allocation2 + $0x50] sm:$0xff]
        %v831 = vld [vmem:[#allocation2 + $0x58] sm:$0xff]
        %v832 = vld [vmem:[#allocation2 + $0x60] sm:$0xff]
        %v833 = vld [vmem:[#allocation2 + $0x68] sm:$0xff]
        %v834 = vld [vmem:[#allocation2 + $0x70] sm:$0xff]
        %v835 = vld [vmem:[#allocation2 + $0x78] sm:$0xff]
        %v836 = vld [vmem:[#allocation2 + $0x80] sm:$0xff]
        %v837 = vld [vmem:[#allocation2 + $0x88] sm:$0xff]
        %v838 = vld [vmem:[#allocation2 + $0x90] sm:$0xff]
        %v839 = vld [vmem:[#allocation2 + $0x98] sm:$0xff]
        %v840 = vld [vmem:[#allocation2 + $0xa0] sm:$0xff]
        %v841 = vld [vmem:[#allocation2 + $0xa8] sm:$0xff]
        %v842 = vld [vmem:[#allocation2 + $0xb0] sm:$0xff]
        %v843 = vld [vmem:[#allocation2 + $0xb8] sm:$0xff]
        %v844 = vld [vmem:[#allocation2 + $0xc0] sm:$0xff]
        %v845 = vld [vmem:[#allocation2 + $0xc8] sm:$0xff]
        %v846 = vld [vmem:[#allocation2 + $0xd0] sm:$0xff]
        %v847 = vld [vmem:[#allocation2 + $0xd8] sm:$0xff]
        %v848 = vld [vmem:[#allocation2 + $0xe0] sm:$0xff]
        %v849 = vld [vmem:[#allocation2 + $0xe8] sm:$0xff]
        %v850 = vld [vmem:[#allocation2 + $0xf0] sm:$0xff]
        %v851 = vld [vmem:[#allocation2 + $0xf8] sm:$0xff]
        %v852 = vld [vmem:[#allocation2 + $0x100] sm:$0xff]
        %v853 = vld [vmem:[#allocation2 + $0x108] sm:$0xff]
        %v854 = vld [vmem:[#allocation2 + $0x110] sm:$0xff]
        %v855 = vld [vmem:[#allocation2 + $0x118] sm:$0xff]
        %v856 = vld [vmem:[#allocation2 + $0x120] sm:$0xff]
        %v857 = vld [vmem:[#allocation2 + $0x128] sm:$0xff]
        %v858 = vld [vmem:[#allocation2 + $0x130] sm:$0xff]
        %v859 = vld [vmem:[#allocation2 + $0x138] sm:$0xff]
        %v860 = vld [vmem:[#allocation2 + $0x140] sm:$0xff]
        %v861 = vld [vmem:[#allocation2 + $0x148] sm:$0xff]
        %v862 = vld [vmem:[#allocation2 + $0x150] sm:$0xff]
        %v863 = vld [vmem:[#allocation2 + $0x158] sm:$0xff]
        %v864 = vld [vmem:[#allocation2 + $0x160] sm:$0xff]
        %v865 = vld [vmem:[#allocation2 + $0x168] sm:$0xff]
        %v866 = vld [vmem:[#allocation2 + $0x170] sm:$0xff]
        %v867 = vld [vmem:[#allocation2 + $0x178] sm:$0xff]
        %v868 = vld [vmem:[#allocation2 + $0x180] sm:$0xff]
        %v869 = vld [vmem:[#allocation2 + $0x188] sm:$0xff]
        %v870 = vld [vmem:[#allocation2 + $0x190] sm:$0xff]
        %v871 = vld [vmem:[#allocation2 + $0x198] sm:$0xff]
        %v872 = vld [vmem:[#allocation2 + $0x1a0] sm:$0xff]
        %v873 = vld [vmem:[#allocation2 + $0x1a8] sm:$0xff]
        %v874 = vld [vmem:[#allocation2 + $0x1b0] sm:$0xff]
        %v875 = vld [vmem:[#allocation2 + $0x1b8] sm:$0xff]
        %v876 = vld [vmem:[#allocation2 + $0x1c0] sm:$0xff]
        %v877 = vld [vmem:[#allocation2 + $0x1c8] sm:$0xff]
        %v878 = vld [vmem:[#allocation2 + $0x1d0] sm:$0xff]
        %v879 = vld [vmem:[#allocation2 + $0x1d8] sm:$0xff]
        %v880 = vld [vmem:[#allocation2 + $0x1e0] sm:$0xff]
        %v881 = vld [vmem:[#allocation2 + $0x1e8] sm:$0xff]
        %v882 = vld [vmem:[#allocation2 + $0x1f0] sm:$0xff]
        %v883 = vld [vmem:[#allocation2 + $0x1f8] sm:$0xff]
        %884 = vmatprep.subr.mxu0 %v881
        %885 = vmatpush1.msra.mxu0 %v880
        %886 = vmatprep.subr.mxu0 %v877
        %887 = vmatpush1.msra.mxu0 %v876
        %888 = vmatprep.subr.mxu0 %v873
        %889 = vmatpush1.msra.mxu0 %v872
        %890 = vmatprep.subr.mxu0 %v869
        %891 = vmatpush1.msra.mxu0 %v868
        %892 = vmatprep.subr.mxu0 %v865
        %893 = vmatpush1.msra.mxu0 %v864
        %894 = vmatprep.subr.mxu0 %v861
        %895 = vmatpush1.msra.mxu0 %v860
        %896 = vmatprep.subr.mxu0 %v857
        %897 = vmatpush1.msra.mxu0 %v856
        %898 = vmatprep.subr.mxu0 %v853
        %899 = vmatpush1.msra.mxu0 %v852
        %900 = vmatprep.subr.mxu0 %v849
        %901 = vmatpush1.msra.mxu0 %v848
        %902 = vmatprep.subr.mxu0 %v845
        %903 = vmatpush1.msra.mxu0 %v844
        %904 = vmatprep.subr.mxu0 %v841
        %905 = vmatpush1.msra.mxu0 %v840
        %906 = vmatprep.subr.mxu0 %v837
        %907 = vmatpush1.msra.mxu0 %v836
        %908 = vmatprep.subr.mxu0 %v833
        %909 = vmatpush1.msra.mxu0 %v832
        %910 = vmatprep.subr.mxu0 %v829
        %911 = vmatpush1.msra.mxu0 %v828
        %912 = vmatprep.subr.mxu0 %v825
        %913 = vmatpush1.msra.mxu0 %v824
        %914 = vmatprep.subr.mxu0 %v821
        %915 = vmatpush1.msra.mxu0 %v820
        %916 = vmatprep.subr.mxu0 0.0
        %917 = vmatpush2.msra.mxu0 0.0
        %918 = vmatprep.subr.mxu0 0.0
        %919 = vmatpush2.msra.mxu0 0.0
        %920 = vmatprep.subr.mxu0 0.0
        %921 = vmatpush2.msra.mxu0 0.0
        %922 = vmatprep.subr.mxu0 0.0
        %923 = vmatpush2.msra.mxu0 0.0
        %924 = vmatprep.subr.mxu0 0.0
        %925 = vmatpush2.msra.mxu0 0.0
        %926 = vmatprep.subr.mxu0 0.0
        %927 = vmatpush2.msra.mxu0 0.0
        %928 = vmatprep.subr.mxu0 0.0
        %929 = vmatpush2.msra.mxu0 0.0
        %930 = vmatprep.subr.mxu0 0.0
        %931 = vmatpush2.msra.mxu0 0.0
        %932 = vmatprep.subr.mxu0 0.0
        %933 = vmatpush2.msra.mxu0 0.0
        %934 = vmatprep.subr.mxu0 0.0
        %935 = vmatpush2.msra.mxu0 0.0
        %936 = vmatprep.subr.mxu0 0.0
        %937 = vmatpush2.msra.mxu0 0.0
        %938 = vmatprep.subr.mxu0 0.0
        %939 = vmatpush2.msra.mxu0 0.0
        %940 = vmatprep.subr.mxu0 0.0
        %941 = vmatpush2.msra.mxu0 0.0
        %942 = vmatprep.subr.mxu0 0.0
        %943 = vmatpush2.msra.mxu0 0.0
        %944 = vmatprep.subr.mxu0 0.0
        %945 = vmatpush2.msra.mxu0 0.0
        %946 = vmatprep.subr.mxu0 0.0
        %947 = vmatpush2.msra.mxu0 0.0
        %948 = vmatprep.mubr.f32.mxu0 0.0
        %949 = vmatmul.mubr.f32.gmra.mxu0 %v812
        %v950 = vpop.f32.mrf.mxu0
        %v951 = vadd.f32 0.0, %v950
        %v952 = vpop.f32.mrf.mxu0
        %v953 = vadd.f32 0.0, %v952
        %954 = vdwg.mxu0
        %955 = vmatprep.subr.mxu0 %v883
        %956 = vmatpush1.msra.mxu0 %v882
        %957 = vmatprep.subr.mxu0 %v879
        %958 = vmatpush1.msra.mxu0 %v878
        %959 = vmatprep.subr.mxu0 %v875
        %960 = vmatpush1.msra.mxu0 %v874
        %961 = vmatprep.subr.mxu0 %v871
        %962 = vmatpush1.msra.mxu0 %v870
        %963 = vmatprep.subr.mxu0 %v867
        %964 = vmatpush1.msra.mxu0 %v866
        %965 = vmatprep.subr.mxu0 %v863
        %966 = vmatpush1.msra.mxu0 %v862
        %967 = vmatprep.subr.mxu0 %v859
        %968 = vmatpush1.msra.mxu0 %v858
        %969 = vmatprep.subr.mxu0 %v855
        %970 = vmatpush1.msra.mxu0 %v854
        %971 = vmatprep.subr.mxu0 %v851
        %972 = vmatpush1.msra.mxu0 %v850
        %973 = vmatprep.subr.mxu0 %v847
        %974 = vmatpush1.msra.mxu0 %v846
        %975 = vmatprep.subr.mxu0 %v843
        %976 = vmatpush1.msra.mxu0 %v842
        %977 = vmatprep.subr.mxu0 %v839
        %978 = vmatpush1.msra.mxu0 %v838
        %979 = vmatprep.subr.mxu0 %v835
        %980 = vmatpush1.msra.mxu0 %v834
        %981 = vmatprep.subr.mxu0 %v831
        %982 = vmatpush1.msra.mxu0 %v830
        %983 = vmatprep.subr.mxu0 %v827
        %984 = vmatpush1.msra.mxu0 %v826
        %985 = vmatprep.subr.mxu0 %v823
        %986 = vmatpush1.msra.mxu0 %v822
        %987 = vmatprep.subr.mxu0 0.0
        %988 = vmatpush2.msra.mxu0 0.0
        %989 = vmatprep.subr.mxu0 0.0
        %990 = vmatpush2.msra.mxu0 0.0
        %991 = vmatprep.subr.mxu0 0.0
        %992 = vmatpush2.msra.mxu0 0.0
        %993 = vmatprep.subr.mxu0 0.0
        %994 = vmatpush2.msra.mxu0 0.0
        %995 = vmatprep.subr.mxu0 0.0
        %996 = vmatpush2.msra.mxu0 0.0
        %997 = vmatprep.subr.mxu0 0.0
        %998 = vmatpush2.msra.mxu0 0.0
        %999 = vmatprep.subr.mxu0 0.0
        %1000 = vmatpush2.msra.mxu0 0.0
        %1001 = vmatprep.subr.mxu0 0.0
        %1002 = vmatpush2.msra.mxu0 0.0
        %1003 = vmatprep.subr.mxu0 0.0
        %1004 = vmatpush2.msra.mxu0 0.0
        %1005 = vmatprep.subr.mxu0 0.0
        %1006 = vmatpush2.msra.mxu0 0.0
        %1007 = vmatprep.subr.mxu0 0.0
        %1008 = vmatpush2.msra.mxu0 0.0
        %1009 = vmatprep.subr.mxu0 0.0
        %1010 = vmatpush2.msra.mxu0 0.0
        %1011 = vmatprep.subr.mxu0 0.0
        %1012 = vmatpush2.msra.mxu0 0.0
        %1013 = vmatprep.subr.mxu0 0.0
        %1014 = vmatpush2.msra.mxu0 0.0
        %1015 = vmatprep.subr.mxu0 0.0
        %1016 = vmatpush2.msra.mxu0 0.0
        %1017 = vmatprep.subr.mxu0 0.0
        %1018 = vmatpush2.msra.mxu0 0.0
        %1019 = vmatprep.mubr.f32.mxu0 0.0
        %1020 = vmatmul.mubr.f32.gmra.mxu0 %v812
        %v1021 = vpop.f32.mrf.mxu0
        %v1022 = vadd.f32 0.0, %v1021
        %v1023 = vpop.f32.mrf.mxu0
        %v1024 = vadd.f32 0.0, %v1023
        %1025 = vdwg.mxu0
        %v1026 = vadd.f32 %v816, %v951
        %v1027 = vadd.f32 %v817, %v953
        %v1028 = vadd.f32 %v818, %v1022
        %v1029 = vadd.f32 %v819, %v1024
        %v1030 = vxor.u32 %v1026, 2147483648
        %v1031 = vmul.f32 %v1030, 1.442695
        %v1032 = vpow.pop %v1031
        %v1033 = vadd.f32 %v1032, 1.0
        %v1034 = vrcp.pop %v1033
        %v1035 = vmul.f32 1.0, %v1034
        %v1036 = vxor.u32 %v1027, 2147483648
        %v1037 = vmul.f32 %v1036, 1.442695
        %v1038 = vpow.pop %v1037
        %v1039 = vadd.f32 %v1038, 1.0
        %v1040 = vrcp.pop %v1039
        %v1041 = vmul.f32 1.0, %v1040
        %v1042 = vtanh.pop %v1028
        %v1043 = vxor.u32 %v1029, 2147483648
        %v1044 = vmul.f32 %v1043, 1.442695
        %v1045 = vpow.pop %v1044
        %v1046 = vadd.f32 %v1045, 1.0
        %v1047 = vrcp.pop %v1046
        %v1048 = vmul.f32 1.0, %v1047
        %v1049 = vmul.f32 %v1041, %v810
        %v1050 = vmul.f32 %v1035, %v1042
        %v1051 = vadd.f32 %v1049, %v1050
        %v1052 = vtanh.pop %v1051
        %v1053 = vmul.f32 %v1048, %v1052
        %s1054 = scalar_lea.vmem %s303, 16 [#allocation12]
        %1055 = vst [vmem:[%s1054] sm:$0xff] %v1053
        %s1056 = scalar_lea.vmem %s273, 96 [#allocation6]
        %v1057 = vld [vmem:[%s1056] sm:$0xff]
        %v1058 = vld [vmem:[%s1056 + $0x8] sm:$0xff]
        %v1059 = vld [vmem:[%s1056 + $0x10] sm:$0xff]
        %v1060 = vld [vmem:[%s1056 + $0x18] sm:$0xff]
        %v1061 = vld [vmem:[#allocation2] sm:$0xff]
        %v1062 = vld [vmem:[#allocation2 + $0x8] sm:$0xff]
        %v1063 = vld [vmem:[#allocation2 + $0x10] sm:$0xff]
        %v1064 = vld [vmem:[#allocation2 + $0x18] sm:$0xff]
        %v1065 = vld [vmem:[#allocation2 + $0x20] sm:$0xff]
        %v1066 = vld [vmem:[#allocation2 + $0x28] sm:$0xff]
        %v1067 = vld [vmem:[#allocation2 + $0x30] sm:$0xff]
        %v1068 = vld [vmem:[#allocation2 + $0x38] sm:$0xff]
        %v1069 = vld [vmem:[#allocation2 + $0x40] sm:$0xff]
        %v1070 = vld [vmem:[#allocation2 + $0x48] sm:$0xff]
        %v1071 = vld [vmem:[#allocation2 + $0x50] sm:$0xff]
        %v1072 = vld [vmem:[#allocation2 + $0x58] sm:$0xff]
        %v1073 = vld [vmem:[#allocation2 + $0x60] sm:$0xff]
        %v1074 = vld [vmem:[#allocation2 + $0x68] sm:$0xff]
        %v1075 = vld [vmem:[#allocation2 + $0x70] sm:$0xff]
        %v1076 = vld [vmem:[#allocation2 + $0x78] sm:$0xff]
        %v1077 = vld [vmem:[#allocation2 + $0x80] sm:$0xff]
        %v1078 = vld [vmem:[#allocation2 + $0x88] sm:$0xff]
        %v1079 = vld [vmem:[#allocation2 + $0x90] sm:$0xff]
        %v1080 = vld [vmem:[#allocation2 + $0x98] sm:$0xff]
        %v1081 = vld [vmem:[#allocation2 + $0xa0] sm:$0xff]
        %v1082 = vld [vmem:[#allocation2 + $0xa8] sm:$0xff]
        %v1083 = vld [vmem:[#allocation2 + $0xb0] sm:$0xff]
        %v1084 = vld [vmem:[#allocation2 + $0xb8] sm:$0xff]
        %v1085 = vld [vmem:[#allocation2 + $0xc0] sm:$0xff]
        %v1086 = vld [vmem:[#allocation2 + $0xc8] sm:$0xff]
        %v1087 = vld [vmem:[#allocation2 + $0xd0] sm:$0xff]
        %v1088 = vld [vmem:[#allocation2 + $0xd8] sm:$0xff]
        %v1089 = vld [vmem:[#allocation2 + $0xe0] sm:$0xff]
        %v1090 = vld [vmem:[#allocation2 + $0xe8] sm:$0xff]
        %v1091 = vld [vmem:[#allocation2 + $0xf0] sm:$0xff]
        %v1092 = vld [vmem:[#allocation2 + $0xf8] sm:$0xff]
        %v1093 = vld [vmem:[#allocation2 + $0x100] sm:$0xff]
        %v1094 = vld [vmem:[#allocation2 + $0x108] sm:$0xff]
        %v1095 = vld [vmem:[#allocation2 + $0x110] sm:$0xff]
        %v1096 = vld [vmem:[#allocation2 + $0x118] sm:$0xff]
        %v1097 = vld [vmem:[#allocation2 + $0x120] sm:$0xff]
        %v1098 = vld [vmem:[#allocation2 + $0x128] sm:$0xff]
        %v1099 = vld [vmem:[#allocation2 + $0x130] sm:$0xff]
        %v1100 = vld [vmem:[#allocation2 + $0x138] sm:$0xff]
        %v1101 = vld [vmem:[#allocation2 + $0x140] sm:$0xff]
        %v1102 = vld [vmem:[#allocation2 + $0x148] sm:$0xff]
        %v1103 = vld [vmem:[#allocation2 + $0x150] sm:$0xff]
        %v1104 = vld [vmem:[#allocation2 + $0x158] sm:$0xff]
        %v1105 = vld [vmem:[#allocation2 + $0x160] sm:$0xff]
        %v1106 = vld [vmem:[#allocation2 + $0x168] sm:$0xff]
        %v1107 = vld [vmem:[#allocation2 + $0x170] sm:$0xff]
        %v1108 = vld [vmem:[#allocation2 + $0x178] sm:$0xff]
        %v1109 = vld [vmem:[#allocation2 + $0x180] sm:$0xff]
        %v1110 = vld [vmem:[#allocation2 + $0x188] sm:$0xff]
        %v1111 = vld [vmem:[#allocation2 + $0x190] sm:$0xff]
        %v1112 = vld [vmem:[#allocation2 + $0x198] sm:$0xff]
        %v1113 = vld [vmem:[#allocation2 + $0x1a0] sm:$0xff]
        %v1114 = vld [vmem:[#allocation2 + $0x1a8] sm:$0xff]
        %v1115 = vld [vmem:[#allocation2 + $0x1b0] sm:$0xff]
        %v1116 = vld [vmem:[#allocation2 + $0x1b8] sm:$0xff]
        %v1117 = vld [vmem:[#allocation2 + $0x1c0] sm:$0xff]
        %v1118 = vld [vmem:[#allocation2 + $0x1c8] sm:$0xff]
        %v1119 = vld [vmem:[#allocation2 + $0x1d0] sm:$0xff]
        %v1120 = vld [vmem:[#allocation2 + $0x1d8] sm:$0xff]
        %v1121 = vld [vmem:[#allocation2 + $0x1e0] sm:$0xff]
        %v1122 = vld [vmem:[#allocation2 + $0x1e8] sm:$0xff]
        %v1123 = vld [vmem:[#allocation2 + $0x1f0] sm:$0xff]
        %v1124 = vld [vmem:[#allocation2 + $0x1f8] sm:$0xff]
        %1125 = vmatprep.subr.mxu0 %v1122
        %1126 = vmatpush1.msra.mxu0 %v1121
        %1127 = vmatprep.subr.mxu0 %v1118
        %1128 = vmatpush1.msra.mxu0 %v1117
        %1129 = vmatprep.subr.mxu0 %v1114
        %1130 = vmatpush1.msra.mxu0 %v1113
        %1131 = vmatprep.subr.mxu0 %v1110
        %1132 = vmatpush1.msra.mxu0 %v1109
        %1133 = vmatprep.subr.mxu0 %v1106
        %1134 = vmatpush1.msra.mxu0 %v1105
        %1135 = vmatprep.subr.mxu0 %v1102
        %1136 = vmatpush1.msra.mxu0 %v1101
        %1137 = vmatprep.subr.mxu0 %v1098
        %1138 = vmatpush1.msra.mxu0 %v1097
        %1139 = vmatprep.subr.mxu0 %v1094
        %1140 = vmatpush1.msra.mxu0 %v1093
        %1141 = vmatprep.subr.mxu0 %v1090
        %1142 = vmatpush1.msra.mxu0 %v1089
        %1143 = vmatprep.subr.mxu0 %v1086
        %1144 = vmatpush1.msra.mxu0 %v1085
        %1145 = vmatprep.subr.mxu0 %v1082
        %1146 = vmatpush1.msra.mxu0 %v1081
        %1147 = vmatprep.subr.mxu0 %v1078
        %1148 = vmatpush1.msra.mxu0 %v1077
        %1149 = vmatprep.subr.mxu0 %v1074
        %1150 = vmatpush1.msra.mxu0 %v1073
        %1151 = vmatprep.subr.mxu0 %v1070
        %1152 = vmatpush1.msra.mxu0 %v1069
        %1153 = vmatprep.subr.mxu0 %v1066
        %1154 = vmatpush1.msra.mxu0 %v1065
        %1155 = vmatprep.subr.mxu0 %v1062
        %1156 = vmatpush1.msra.mxu0 %v1061
        %1157 = vmatprep.subr.mxu0 0.0
        %1158 = vmatpush2.msra.mxu0 0.0
        %1159 = vmatprep.subr.mxu0 0.0
        %1160 = vmatpush2.msra.mxu0 0.0
        %1161 = vmatprep.subr.mxu0 0.0
        %1162 = vmatpush2.msra.mxu0 0.0
        %1163 = vmatprep.subr.mxu0 0.0
        %1164 = vmatpush2.msra.mxu0 0.0
        %1165 = vmatprep.subr.mxu0 0.0
        %1166 = vmatpush2.msra.mxu0 0.0
        %1167 = vmatprep.subr.mxu0 0.0
        %1168 = vmatpush2.msra.mxu0 0.0
        %1169 = vmatprep.subr.mxu0 0.0
        %1170 = vmatpush2.msra.mxu0 0.0
        %1171 = vmatprep.subr.mxu0 0.0
        %1172 = vmatpush2.msra.mxu0 0.0
        %1173 = vmatprep.subr.mxu0 0.0
        %1174 = vmatpush2.msra.mxu0 0.0
        %1175 = vmatprep.subr.mxu0 0.0
        %1176 = vmatpush2.msra.mxu0 0.0
        %1177 = vmatprep.subr.mxu0 0.0
        %1178 = vmatpush2.msra.mxu0 0.0
        %1179 = vmatprep.subr.mxu0 0.0
        %1180 = vmatpush2.msra.mxu0 0.0
        %1181 = vmatprep.subr.mxu0 0.0
        %1182 = vmatpush2.msra.mxu0 0.0
        %1183 = vmatprep.subr.mxu0 0.0
        %1184 = vmatpush2.msra.mxu0 0.0
        %1185 = vmatprep.subr.mxu0 0.0
        %1186 = vmatpush2.msra.mxu0 0.0
        %1187 = vmatprep.subr.mxu0 0.0
        %1188 = vmatpush2.msra.mxu0 0.0
        %1189 = vmatprep.mubr.f32.mxu0 0.0
        %1190 = vmatmul.mubr.f32.gmra.mxu0 %v1053
        %v1191 = vpop.f32.mrf.mxu0
        %v1192 = vadd.f32 0.0, %v1191
        %v1193 = vpop.f32.mrf.mxu0
        %v1194 = vadd.f32 0.0, %v1193
        %1195 = vdwg.mxu0
        %1196 = vmatprep.subr.mxu0 %v1124
        %1197 = vmatpush1.msra.mxu0 %v1123
        %1198 = vmatprep.subr.mxu0 %v1120
        %1199 = vmatpush1.msra.mxu0 %v1119
        %1200 = vmatprep.subr.mxu0 %v1116
        %1201 = vmatpush1.msra.mxu0 %v1115
        %1202 = vmatprep.subr.mxu0 %v1112
        %1203 = vmatpush1.msra.mxu0 %v1111
        %1204 = vmatprep.subr.mxu0 %v1108
        %1205 = vmatpush1.msra.mxu0 %v1107
        %1206 = vmatprep.subr.mxu0 %v1104
        %1207 = vmatpush1.msra.mxu0 %v1103
        %1208 = vmatprep.subr.mxu0 %v1100
        %1209 = vmatpush1.msra.mxu0 %v1099
        %1210 = vmatprep.subr.mxu0 %v1096
        %1211 = vmatpush1.msra.mxu0 %v1095
        %1212 = vmatprep.subr.mxu0 %v1092
        %1213 = vmatpush1.msra.mxu0 %v1091
        %1214 = vmatprep.subr.mxu0 %v1088
        %1215 = vmatpush1.msra.mxu0 %v1087
        %1216 = vmatprep.subr.mxu0 %v1084
        %1217 = vmatpush1.msra.mxu0 %v1083
        %1218 = vmatprep.subr.mxu0 %v1080
        %1219 = vmatpush1.msra.mxu0 %v1079
        %1220 = vmatprep.subr.mxu0 %v1076
        %1221 = vmatpush1.msra.mxu0 %v1075
        %1222 = vmatprep.subr.mxu0 %v1072
        %1223 = vmatpush1.msra.mxu0 %v1071
        %1224 = vmatprep.subr.mxu0 %v1068
        %1225 = vmatpush1.msra.mxu0 %v1067
        %1226 = vmatprep.subr.mxu0 %v1064
        %1227 = vmatpush1.msra.mxu0 %v1063
        %1228 = vmatprep.subr.mxu0 0.0
        %1229 = vmatpush2.msra.mxu0 0.0
        %1230 = vmatprep.subr.mxu0 0.0
        %1231 = vmatpush2.msra.mxu0 0.0
        %1232 = vmatprep.subr.mxu0 0.0
        %1233 = vmatpush2.msra.mxu0 0.0
        %1234 = vmatprep.subr.mxu0 0.0
        %1235 = vmatpush2.msra.mxu0 0.0
        %1236 = vmatprep.subr.mxu0 0.0
        %1237 = vmatpush2.msra.mxu0 0.0
        %1238 = vmatprep.subr.mxu0 0.0
        %1239 = vmatpush2.msra.mxu0 0.0
        %1240 = vmatprep.subr.mxu0 0.0
        %1241 = vmatpush2.msra.mxu0 0.0
        %1242 = vmatprep.subr.mxu0 0.0
        %1243 = vmatpush2.msra.mxu0 0.0
        %1244 = vmatprep.subr.mxu0 0.0
        %1245 = vmatpush2.msra.mxu0 0.0
        %1246 = vmatprep.subr.mxu0 0.0
        %1247 = vmatpush2.msra.mxu0 0.0
        %1248 = vmatprep.subr.mxu0 0.0
        %1249 = vmatpush2.msra.mxu0 0.0
        %1250 = vmatprep.subr.mxu0 0.0
        %1251 = vmatpush2.msra.mxu0 0.0
        %1252 = vmatprep.subr.mxu0 0.0
        %1253 = vmatpush2.msra.mxu0 0.0
        %1254 = vmatprep.subr.mxu0 0.0
        %1255 = vmatpush2.msra.mxu0 0.0
        %1256 = vmatprep.subr.mxu0 0.0
        %1257 = vmatpush2.msra.mxu0 0.0
        %1258 = vmatprep.subr.mxu0 0.0
        %1259 = vmatpush2.msra.mxu0 0.0
        %1260 = vmatprep.mubr.f32.mxu0 0.0
        %1261 = vmatmul.mubr.f32.gmra.mxu0 %v1053
        %v1262 = vpop.f32.mrf.mxu0
        %v1263 = vadd.f32 0.0, %v1262
        %v1264 = vpop.f32.mrf.mxu0
        %v1265 = vadd.f32 0.0, %v1264
        %1266 = vdwg.mxu0
        %v1267 = vadd.f32 %v1057, %v1192
        %v1268 = vadd.f32 %v1058, %v1194
        %v1269 = vadd.f32 %v1059, %v1263
        %v1270 = vadd.f32 %v1060, %v1265
        %v1271 = vxor.u32 %v1267, 2147483648
        %v1272 = vmul.f32 %v1271, 1.442695
        %v1273 = vpow.pop %v1272
        %v1274 = vadd.f32 %v1273, 1.0
        %v1275 = vrcp.pop %v1274
        %v1276 = vmul.f32 1.0, %v1275
        %v1277 = vxor.u32 %v1268, 2147483648
        %v1278 = vmul.f32 %v1277, 1.442695
        %v1279 = vpow.pop %v1278
        %v1280 = vadd.f32 %v1279, 1.0
        %v1281 = vrcp.pop %v1280
        %v1282 = vmul.f32 1.0, %v1281
        %v1283 = vtanh.pop %v1269
        %v1284 = vxor.u32 %v1270, 2147483648
        %v1285 = vmul.f32 %v1284, 1.442695
        %v1286 = vpow.pop %v1285
        %v1287 = vadd.f32 %v1286, 1.0
        %v1288 = vrcp.pop %v1287
        %v1289 = vmul.f32 1.0, %v1288
        %v1290 = vmul.f32 %v1282, %v1051
        %v1291 = vmul.f32 %v1276, %v1283
        %v1292 = vadd.f32 %v1290, %v1291
        %v1293 = vtanh.pop %v1292
        %v1294 = vmul.f32 %v1289, %v1293
        %s1295 = scalar_lea.vmem %s303, 24 [#allocation12]
        %1296 = vst [vmem:[%s1295] sm:$0xff] %v1294
        %1297 = vst [vmem:[#allocation3] sm:$0xff] %v1294
        %1298 = vst [vmem:[#allocation4] sm:$0xff] %v1292
        %p1299 = scmp.eq.s32.totalorder %s31, 1
        // Predicated region
        $region53: #{tpu_custom_call.1} parent=31 // pred_check
          %p1300 = pneg %p1299
        $region54: #{tpu_custom_call.1} parent=31 // pred_check_branch
          %1302 = sbr.rel (%p1300) target = $region56
        $region55: #{tpu_custom_call.1} parent=31 // pred_region
          %1303 = vst [vmem:[#allocation13] sm:$0xff] %v1294
          %1304 = vst [vmem:[#allocation15] sm:$0xff] %v1292
        $region56: #{tpu_custom_call.1} parent=31 // pred_fallthru
          _
        %s1305 = sand.u32 %s128, 1
        %s1306 = scalar_lea.sflag [#allocation8], %s1305
        %s1307 = sand.u32 %s128, 1
        %s1308 = smul.addr %s1307, 32
        %s1309 = scalar_lea.vmem [#allocation12], %s1308
        // Predicated region
        $region57: #{tpu_custom_call.1} parent=31 // pred_check
          %p1310 = pneg %p138
        $region58: #{tpu_custom_call.1} parent=31 // pred_check_branch
          %1312 = sbr.rel (%p1310) target = $region60
        $region59: #{tpu_custom_call.1} parent=31 // pred_region
          %s1313 = smul.u32 4, %s31
          %s1315 = ssub.s32 512, 512
          %1316 = vsyncadd %s1306, %s1315
          %s1317 = sadd.s32 %s30, %s1313
          %s1318 = smul.addr %s1317, 128
          %s1319 = scalar_lea.hbm %s4, %s1318
          %s1320 = sshll.u32 %s1309, 4
          %s1321 = int_to_ptr.vmem [resolvable:$true] %s1320
          %1326 = dma.vmem_to_hbm [thread:$0]  %s1321, 512, %s1319, %s1306, 128, 128, 8
        $region60: #{tpu_custom_call.1} parent=31 // pred_fallthru
          _
        // Predicated region
        $region61: #{tpu_custom_call.1} parent=31 // pred_check
          %p1327 = pneg %p164
        $region62: #{tpu_custom_call.1} parent=31 // pred_check_branch
          %1329 = sbr.rel (%p1327) target = $region64
        $region63: #{tpu_custom_call.1} parent=31 // pred_region
          %s1331 = ssub.s32 128, 128
          %1332 = vsyncadd [#allocation14], %s1331
          %s1333 = smul.addr %s30, 128
          %s1334 = scalar_lea.hbm %s5, %s1333
          %s1336 = sshll.u32 [#allocation13], 4
          %s1337 = int_to_ptr.vmem [resolvable:$true] %s1336
          %1339 = dma.vmem_to_hbm [thread:$0]  %s1337, 128, %s1334, [#allocation14]
        $region64: #{tpu_custom_call.1} parent=31 // pred_fallthru
          _
        // Predicated region
        $region65: #{tpu_custom_call.1} parent=31 // pred_check
          %p1340 = pneg %p190
        $region66: #{tpu_custom_call.1} parent=31 // pred_check_branch
          %1342 = sbr.rel (%p1340) target = $region68
        $region67: #{tpu_custom_call.1} parent=31 // pred_region
          %s1344 = ssub.s32 128, 128
          %1345 = vsyncadd [#allocation14], %s1344
          %s1346 = smul.addr %s30, 128
          %s1347 = scalar_lea.hbm %s6, %s1346
          %s1349 = sshll.u32 [#allocation15], 4
          %s1350 = int_to_ptr.vmem [resolvable:$true] %s1349
          %1352 = dma.vmem_to_hbm [thread:$0]  %s1350, 128, %s1347, [#allocation14]
        $region68: #{tpu_custom_call.1} parent=31 // pred_fallthru
          _
        // Predicated region
        $region69: #{tpu_custom_call.1} parent=31 // pred_check
          %p1353 = pneg %p164
        $region70: #{tpu_custom_call.1} parent=31 // pred_check_branch
          %1355 = sbr.rel (%p1353) target = $region72
        $region71: #{tpu_custom_call.1} parent=31 // pred_region
          %1356 = dma.done [#allocation14], 128
        $region72: #{tpu_custom_call.1} parent=31 // pred_fallthru
          _
        // Predicated region
        $region73: #{tpu_custom_call.1} parent=31 // pred_check
          %p1357 = pneg %p190
        $region74: #{tpu_custom_call.1} parent=31 // pred_check_branch
          %1359 = sbr.rel (%p1357) target = $region76
        $region75: #{tpu_custom_call.1} parent=31 // pred_region
          %1360 = dma.done [#allocation14], 128
        $region76: #{tpu_custom_call.1} parent=31 // pred_fallthru
          _
      $region32: #{tpu_custom_call.1} parent=5 // pred_fallthru
        _
      %p1361 = scmp.le.s32.totalorder 2, %s21
      // Predicated region
      $region77: #{tpu_custom_call.1} parent=5 // pred_check
        %p1362 = pneg %p1361
      $region78: #{tpu_custom_call.1} parent=5 // pred_check_branch
        %1364 = sbr.rel (%p1362) target = $region80
      $region79: #{tpu_custom_call.1} parent=5 // pred_region
        %s1365 = ssub.s32 %s21, 2
        // Predicated region
        $region81: #{tpu_custom_call.1} parent=79 // pred_check
          %p1366 = pneg %p144
        $region82: #{tpu_custom_call.1} parent=79 // pred_check_branch
          %1368 = sbr.rel (%p1366) target = $region84
        $region83: #{tpu_custom_call.1} parent=79 // pred_region
          %s1369 = sand.u32 %s129, 1
          %s1370 = scalar_lea.sflag [#allocation8], %s1369
          %s1371 = sand.u32 %s129, 1
          %s1372 = smul.addr %s1371, 32
          %s1373 = scalar_lea.vmem [#allocation12], %s1372
          %1374 = dma.done %s1370, 512
        $region84: #{tpu_custom_call.1} parent=79 // pred_fallthru
          _
      $region80: #{tpu_custom_call.1} parent=5 // pred_fallthru
        _
    $region6: #{tpu_custom_call.1} parent=1 // loop_footer
      %s25 = sadd.s32 1, %s21
    $region7: #{tpu_custom_call.1} parent=1 // loop_footer_branch
      %20 = sbr.rel target = $region3
    $region8: #{tpu_custom_call.1} parent=1 // loop_exit
      _
    %1375 = vsyncpa [#allocation7], 1
    %s1376 = scalar_lea.sflag [#allocation7], 1
    %1377 = vsyncpa %s1376, 1
    %1378 = vsyncpa [#allocation10], 1
    %1379 = vsyncpa [#allocation8], 1
    %s1380 = scalar_lea.sflag [#allocation8], 1
    %1381 = vsyncpa %s1380, 1
    %1382 = vsyncpa [#allocation14], 1
  %1383 = vsyncmov [#allocation5]
  %s1384 = vpop.sfrf %1383
  %p1385 = scmp.eq.s32.totalorder %s1384, 0
  %p1386 = pneg %p1385
  %1388 = shalt.err (%p1386)

</llo_original>
